<compile_context>
chip_gen: v7x
topology: tpu7x:2x2x1
jax: 0.10.0
libtpu: 0.0.40
codegen_flags: <defaults>
</compile_context>

<pallas_src>
import functools

import jax
import jax.numpy as jnp
from jax.experimental import pallas as pl
from jax.experimental.pallas import tpu as pltpu


def _round_up(x, m):
    return ((x + m - 1) // m) * m


def ggnn_kernel(h_ref, adjs_ref, w1o_ref, w1i_ref, w2rz_ref, wt2_ref, ball_ref,
                wfc_ref, bfc_ref, flat_t_ref, flat_m_ref, flat_e_ref,
                out_ref, *, num_steps, m_rows, hp):
    def dot(a, b):
        return jnp.dot(a, b, preferred_element_type=jnp.float32)

    h = h_ref[...]            # (M, Hp)      batch-stacked, lane-padded node states
    adjs = adjs_ref[...]      # (2M, M)      [adj_out_blockdiag ; adj_in_blockdiag]
    w1o = w1o_ref[...]        # (Hp, 3Hp)    fused r/z/t weights for the "out" half
    w1i = w1i_ref[...]        # (Hp, 3Hp)    fused r/z/t weights for the "in" half
    w2rz = w2rz_ref[...]      # (Hp, 2Hp)    fused r2/z2 weights applied to h
    wt2 = wt2_ref[...]        # (Hp, Hp)     t2 weight applied to r*h
    b_all = ball_ref[...]     # (1, 3Hp)     fused gate biases (b_out/b_in folded in)

    # GRU-style propagation (statically unrolled).
    for _ in range(num_steps):
        actv = dot(adjs, h)                       # (2M, Hp): one fused adjacency matmul
        a_out = actv[:m_rows]                     # sublane slice (multiple of 8 here)
        a_in = actv[m_rows:]
        # concat([a_out, a_in], -1) @ W == a_out @ W_top + a_in @ W_bot; the three
        # gates' weights are concatenated along lanes so this is 2 wide matmuls.
        pre = dot(a_out, w1o) + dot(a_in, w1i) + b_all       # (M, 3Hp)
        rz = dot(h, w2rz)                                     # (M, 2Hp)
        r = jax.nn.sigmoid(pre[:, :hp] + rz[:, :hp])          # tile-aligned lane slices
        z = jax.nn.sigmoid(pre[:, hp:2 * hp] + rz[:, hp:])
        h_cap = jnp.tanh(pre[:, 2 * hp:] + dot(r * h, wt2))
        h = (1.0 - z) * h + z * h_cap

    # Output head.  Flatten (M, Hp) -> (B, N*H) without an in-kernel reshape:
    #   h_flat = E @ ((h @ T) * M), where
    #     T (Hp, NHp)  lane-tiles each row's true H block into every node slot,
    #     M (M,  NHp)  keeps only the slot matching the row's node id,
    #     E (B,  M)    sums the N rows belonging to each batch element.
    # Then ONE contraction with the flattened, lane-padded FC weight.
    h_blocks = dot(h, flat_t_ref[...]) * flat_m_ref[...]   # (M, NHp)
    h_flat = dot(flat_e_ref[...], h_blocks)                # (B, NHp)
    out_ref[...] = jax.nn.sigmoid(dot(h_flat, wfc_ref[...]) + bfc_ref[...])


def ggnn_forward(hidden_states, adj_out, adj_in, params, num_steps=3):
    B, N, H = hidden_states.shape
    O = params["b_fc"].shape[-1]
    f32 = jnp.float32
    M = B * N
    Hp = _round_up(H, 128)            # lane-pad hidden so gate slices are tile-aligned
    NH = N * H
    NHp = _round_up(NH, 128)
    O_pad = _round_up(O, 128)

    # (1) Hoist the (batch-invariant) edge-type collapse out of the kernel.
    adj1 = jnp.einsum("ije,e->ij", adj_out, params["w_adj_out"])
    adj2 = jnp.einsum("ije,e->ij", adj_in, params["w_adj_in"])

    # (2) Fold batch into the matmul M dimension: state stacked as (M, Hp),
    #     shared adjacency becomes block-diagonal; stack out/in along M so the
    #     kernel does ONE adjacency matmul per step.
    eye_b = jnp.eye(B, dtype=f32)
    adj_stack = jnp.concatenate(
        [jnp.kron(eye_b, adj1), jnp.kron(eye_b, adj2)], axis=0)          # (2M, M)
    h0 = jnp.zeros((M, Hp), f32).at[:, :H].set(hidden_states.reshape(M, H))

    # (3) Split the (2H -> H) gate weights into out/in halves, lane-pad every
    #     (H, H) block to (Hp, Hp), and fuse the three gates along the output axis.
    def padw(w):  # (H, H) -> (Hp, Hp)
        return jnp.zeros((Hp, Hp), f32).at[:H, :H].set(w)

    def padb(b):  # (1, H) -> (1, Hp)
        return jnp.zeros((1, Hp), f32).at[:, :H].set(b)

    wr1o, wr1i = params["w_r1"][:H], params["w_r1"][H:]
    wz1o, wz1i = params["w_z1"][:H], params["w_z1"][H:]
    wt1o, wt1i = params["w_t1"][:H], params["w_t1"][H:]

    w1o_all = jnp.concatenate([padw(wr1o), padw(wz1o), padw(wt1o)], axis=1)  # (Hp, 3Hp)
    w1i_all = jnp.concatenate([padw(wr1i), padw(wz1i), padw(wt1i)], axis=1)  # (Hp, 3Hp)
    w2_rz = jnp.concatenate([padw(params["w_r2"]), padw(params["w_z2"])], axis=1)
    w_t2 = padw(params["w_t2"])

    b_all = jnp.concatenate([padb(params["b_r1"] + params["b_r2"]),
                             padb(params["b_z1"] + params["b_z2"]),
                             padb(params["b_t1"] + params["b_t2"])], axis=1)  # (1, 3Hp)
    # b_out / b_in only ever feed the gate linears, so fold them in exactly.
    b_all = (b_all
             + jnp.dot(padb(params["b_out"]), w1o_all)
             + jnp.dot(padb(params["b_in"]), w1i_all))

    # (4) Output head: flattened FC weight, padded to lane-dense widths.
    w_fc = jnp.zeros((NHp, O_pad), f32).at[:NH, :O].set(params["w_fc"])
    b_fc = jnp.zeros((1, O_pad), f32).at[:, :O].set(params["b_fc"])

    # (5) Constant operands expressing the (M, Hp) -> (B, N*H) flatten as
    #     matmuls + mask (no in-kernel relayout).
    flat_t = jnp.zeros((Hp, NHp), f32).at[:H, :NH].set(
        jnp.tile(jnp.eye(H, dtype=f32), (1, N)))                          # (Hp, NHp)
    node_of_row = jnp.arange(M, dtype=jnp.int32) % N                      # (M,)
    node_of_col = jnp.arange(NHp, dtype=jnp.int32) // H                   # (NHp,)
    flat_m = (node_of_col[None, :] == node_of_row[:, None]).astype(f32)   # (M, NHp)
    flat_e = jnp.kron(eye_b, jnp.ones((1, N), f32))                       # (B, M)

    inputs = (h0, adj_stack, w1o_all, w1i_all, w2_rz, w_t2, b_all,
              w_fc, b_fc, flat_t, flat_m, flat_e)

    vmem = pl.BlockSpec(memory_space=pltpu.MemorySpace.VMEM)
    kernel = functools.partial(ggnn_kernel, num_steps=num_steps, m_rows=M, hp=Hp)

    out = pl.pallas_call(
        kernel,
        out_shape=jax.ShapeDtypeStruct((B, O_pad), jnp.float32),
        in_specs=[vmem] * len(inputs),
        out_specs=vmem,
    )(*inputs)
    return out[:, :O]


def ggnn_reference(hidden_states, adj_out, adj_in, params, num_steps=3):
    """Pure-JAX reference mirroring the PyTorch forward."""
    h = hidden_states
    adj1 = jnp.einsum("ije,e->ij", adj_out, params["w_adj_out"])
    adj2 = jnp.einsum("ije,e->ij", adj_in, params["w_adj_in"])
    for _ in range(num_steps):
        a_out = jnp.einsum("ij,bjh->bih", adj1, h) + params["b_out"]
        a_in = jnp.einsum("ij,bjh->bih", adj2, h) + params["b_in"]
        actv = jnp.concatenate([a_out, a_in], axis=-1)
        r = jax.nn.sigmoid(actv @ params["w_r1"] + params["b_r1"]
                           + h @ params["w_r2"] + params["b_r2"])
        z = jax.nn.sigmoid(actv @ params["w_z1"] + params["b_z1"]
                           + h @ params["w_z2"] + params["b_z2"])
        h_cap = jnp.tanh(actv @ params["w_t1"] + params["b_t1"]
                         + (r * h) @ params["w_t2"] + params["b_t2"])
        h = (1.0 - z) * h + z * h_cap
    B, N, H = h.shape
    flat = h.reshape(B, N * H)
    return jax.nn.sigmoid(flat @ params["w_fc"] + params["b_fc"])


def init_params(key, nodes, hidden_size, num_outputs, edge_types):
    H, N, O, E = hidden_size, nodes, num_outputs, edge_types
    ks = jax.random.split(key, 12)

    def linear(k, fan_in, fan_out):
        kw, kb = jax.random.split(k)
        s = 1.0 / jnp.sqrt(fan_in)
        w = jax.random.uniform(kw, (fan_in, fan_out), jnp.float32, -s, s)
        b = jax.random.uniform(kb, (1, fan_out), jnp.float32, -s, s)
        return w, b

    p = {}
    p["w_adj_out"] = jax.random.normal(ks[0], (E,), jnp.float32)
    p["w_adj_in"] = jax.random.normal(ks[1], (E,), jnp.float32)
    # The PyTorch module initializes these to zero; use small random values here
    # so the test exercises the bias paths.
    p["b_out"] = 0.1 * jax.random.normal(ks[9], (1, H), jnp.float32)
    p["b_in"] = 0.1 * jax.random.normal(ks[10], (1, H), jnp.float32)
    p["w_r1"], p["b_r1"] = linear(ks[2], 2 * H, H)
    p["w_r2"], p["b_r2"] = linear(ks[3], H, H)
    p["w_z1"], p["b_z1"] = linear(ks[4], 2 * H, H)
    p["w_z2"], p["b_z2"] = linear(ks[5], H, H)
    p["w_t1"], p["b_t1"] = linear(ks[6], 2 * H, H)
    p["w_t2"], p["b_t2"] = linear(ks[7], H, H)
    p["w_fc"], p["b_fc"] = linear(ks[8], N * H, O)
    return p


if __name__ == "__main__":
    B, N, H, E, O = 2, 8, 32, 4, 8  # batch, nodes, hidden_size, edge_types, num_outputs

    key = jax.random.PRNGKey(0)
    k_h, k_ao, k_ai, k_p = jax.random.split(key, 4)

    hidden_states = jax.random.normal(k_h, (B, N, H), jnp.float32)
    adj_out = jax.random.bernoulli(k_ao, 0.3, (N, N, E)).astype(jnp.float32)
    adj_in = jax.random.bernoulli(k_ai, 0.3, (N, N, E)).astype(jnp.float32)
    params = init_params(k_p, N, H, O, E)

    out = jax.block_until_ready(
        jax.jit(ggnn_forward)(hidden_states, adj_out, adj_in, params))
    ref = jax.block_until_ready(
        ggnn_reference(hidden_states, adj_out, adj_in, params))

    assert out.shape == (B, O)
    err = float(jnp.max(jnp.abs(out - ref)))
    assert err < 1e-3, f"mismatch vs reference: {err}"
    print("KERNEL_OK")
</pallas_src>

<mosaic_0001>
module attributes {stable_mosaic.version = 11 : i64} {
  func.func @ggnn_kernel(%arg0: memref<16x128xf32, #tpu.memory_space<vmem>>, %arg1: memref<32x16xf32, #tpu.memory_space<vmem>>, %arg2: memref<128x384xf32, #tpu.memory_space<vmem>>, %arg3: memref<128x384xf32, #tpu.memory_space<vmem>>, %arg4: memref<128x256xf32, #tpu.memory_space<vmem>>, %arg5: memref<128x128xf32, #tpu.memory_space<vmem>>, %arg6: memref<1x384xf32, #tpu.memory_space<vmem>>, %arg7: memref<256x128xf32, #tpu.memory_space<vmem>>, %arg8: memref<1x128xf32, #tpu.memory_space<vmem>>, %arg9: memref<128x256xf32, #tpu.memory_space<vmem>>, %arg10: memref<16x256xf32, #tpu.memory_space<vmem>>, %arg11: memref<2x16xf32, #tpu.memory_space<vmem>>, %arg12: memref<2x128xf32, #tpu.memory_space<vmem>>) attributes {dimension_semantics = [], scalar_prefetch = 0 : i64, scratch_operands = 0 : i64, tpu.core_type = #tpu.core_type<tc>} {
    %c0 = arith.constant 0 : index
    %c0_0 = arith.constant 0 : index
    %0 = vector.load %arg0[%c0, %c0_0] : memref<16x128xf32, #tpu.memory_space<vmem>>, vector<16x128xf32>
    %c0_1 = arith.constant 0 : index
    %c0_2 = arith.constant 0 : index
    %1 = vector.load %arg1[%c0_1, %c0_2] : memref<32x16xf32, #tpu.memory_space<vmem>>, vector<32x16xf32>
    %c0_3 = arith.constant 0 : index
    %c0_4 = arith.constant 0 : index
    %2 = vector.load %arg2[%c0_3, %c0_4] : memref<128x384xf32, #tpu.memory_space<vmem>>, vector<128x384xf32>
    %c0_5 = arith.constant 0 : index
    %c0_6 = arith.constant 0 : index
    %3 = vector.load %arg3[%c0_5, %c0_6] : memref<128x384xf32, #tpu.memory_space<vmem>>, vector<128x384xf32>
    %c0_7 = arith.constant 0 : index
    %c0_8 = arith.constant 0 : index
    %4 = vector.load %arg4[%c0_7, %c0_8] : memref<128x256xf32, #tpu.memory_space<vmem>>, vector<128x256xf32>
    %c0_9 = arith.constant 0 : index
    %c0_10 = arith.constant 0 : index
    %5 = vector.load %arg5[%c0_9, %c0_10] : memref<128x128xf32, #tpu.memory_space<vmem>>, vector<128x128xf32>
    %c0_11 = arith.constant 0 : index
    %c0_12 = arith.constant 0 : index
    %6 = vector.load %arg6[%c0_11, %c0_12] : memref<1x384xf32, #tpu.memory_space<vmem>>, vector<1x384xf32>
    %cst = arith.constant dense<0.000000e+00> : vector<32x128xf32>
    %7 = tpu.matmul %1, %0, %cst {dimension_numbers = #tpu.dot_dimension_numbers<[1], [0], [0], [1], [0, 0, 1, 1], [], []>} : vector<32x16xf32>, vector<16x128xf32>, vector<32x128xf32> -> vector<32x128xf32>
    %8 = vector.extract_strided_slice %7 {offsets = [0, 0], sizes = [16, 128], strides = [1, 1]} : vector<32x128xf32> to vector<16x128xf32>
    %9 = vector.extract_strided_slice %7 {offsets = [16, 0], sizes = [16, 128], strides = [1, 1]} : vector<32x128xf32> to vector<16x128xf32>
    %cst_13 = arith.constant dense<0.000000e+00> : vector<16x384xf32>
    %10 = tpu.matmul %8, %2, %cst_13 {dimension_numbers = #tpu.dot_dimension_numbers<[1], [0], [0], [1], [0, 0, 1, 1], [], []>} : vector<16x128xf32>, vector<128x384xf32>, vector<16x384xf32> -> vector<16x384xf32>
    %cst_14 = arith.constant dense<0.000000e+00> : vector<16x384xf32>
    %11 = tpu.matmul %9, %3, %cst_14 {dimension_numbers = #tpu.dot_dimension_numbers<[1], [0], [0], [1], [0, 0, 1, 1], [], []>} : vector<16x128xf32>, vector<128x384xf32>, vector<16x384xf32> -> vector<16x384xf32>
    %12 = arith.addf %10, %11 : vector<16x384xf32>
    %13 = vector.broadcast %6 : vector<1x384xf32> to vector<16x384xf32>
    %14 = arith.addf %12, %13 : vector<16x384xf32>
    %cst_15 = arith.constant dense<0.000000e+00> : vector<16x256xf32>
    %15 = tpu.matmul %0, %4, %cst_15 {dimension_numbers = #tpu.dot_dimension_numbers<[1], [0], [0], [1], [0, 0, 1, 1], [], []>} : vector<16x128xf32>, vector<128x256xf32>, vector<16x256xf32> -> vector<16x256xf32>
    %16 = vector.extract_strided_slice %14 {offsets = [0, 0], sizes = [16, 128], strides = [1, 1]} : vector<16x384xf32> to vector<16x128xf32>
    %17 = vector.extract_strided_slice %15 {offsets = [0, 0], sizes = [16, 128], strides = [1, 1]} : vector<16x256xf32> to vector<16x128xf32>
    %18 = arith.addf %16, %17 : vector<16x128xf32>
    %19 = arith.negf %18 : vector<16x128xf32>
    %20 = math.exp %19 : vector<16x128xf32>
    %cst_16 = arith.constant 1.000000e+00 : f32
    %21 = vector.broadcast %cst_16 : f32 to vector<16x128xf32>
    %22 = arith.addf %21, %20 : vector<16x128xf32>
    %23 = arith.divf %21, %22 : vector<16x128xf32>
    %24 = vector.extract_strided_slice %14 {offsets = [0, 128], sizes = [16, 128], strides = [1, 1]} : vector<16x384xf32> to vector<16x128xf32>
    %25 = vector.extract_strided_slice %15 {offsets = [0, 128], sizes = [16, 128], strides = [1, 1]} : vector<16x256xf32> to vector<16x128xf32>
    %26 = arith.addf %24, %25 : vector<16x128xf32>
    %27 = arith.negf %26 : vector<16x128xf32>
    %28 = math.exp %27 : vector<16x128xf32>
    %cst_17 = arith.constant 1.000000e+00 : f32
    %29 = vector.broadcast %cst_17 : f32 to vector<16x128xf32>
    %30 = arith.addf %29, %28 : vector<16x128xf32>
    %31 = arith.divf %29, %30 : vector<16x128xf32>
    %32 = vector.extract_strided_slice %14 {offsets = [0, 256], sizes = [16, 128], strides = [1, 1]} : vector<16x384xf32> to vector<16x128xf32>
    %33 = arith.mulf %23, %0 : vector<16x128xf32>
    %cst_18 = arith.constant dense<0.000000e+00> : vector<16x128xf32>
    %34 = tpu.matmul %33, %5, %cst_18 {dimension_numbers = #tpu.dot_dimension_numbers<[1], [0], [0], [1], [0, 0, 1, 1], [], []>} : vector<16x128xf32>, vector<128x128xf32>, vector<16x128xf32> -> vector<16x128xf32>
    %35 = arith.addf %32, %34 : vector<16x128xf32>
    %36 = math.tanh %35 : vector<16x128xf32>
    %cst_19 = arith.constant 1.000000e+00 : f32
    %37 = vector.broadcast %cst_19 : f32 to vector<16x128xf32>
    %38 = arith.subf %37, %31 : vector<16x128xf32>
    %39 = arith.mulf %38, %0 : vector<16x128xf32>
    %40 = arith.mulf %31, %36 : vector<16x128xf32>
    %41 = arith.addf %39, %40 : vector<16x128xf32>
    %cst_20 = arith.constant dense<0.000000e+00> : vector<32x128xf32>
    %42 = tpu.matmul %1, %41, %cst_20 {dimension_numbers = #tpu.dot_dimension_numbers<[1], [0], [0], [1], [0, 0, 1, 1], [], []>} : vector<32x16xf32>, vector<16x128xf32>, vector<32x128xf32> -> vector<32x128xf32>
    %43 = vector.extract_strided_slice %42 {offsets = [0, 0], sizes = [16, 128], strides = [1, 1]} : vector<32x128xf32> to vector<16x128xf32>
    %44 = vector.extract_strided_slice %42 {offsets = [16, 0], sizes = [16, 128], strides = [1, 1]} : vector<32x128xf32> to vector<16x128xf32>
    %cst_21 = arith.constant dense<0.000000e+00> : vector<16x384xf32>
    %45 = tpu.matmul %43, %2, %cst_21 {dimension_numbers = #tpu.dot_dimension_numbers<[1], [0], [0], [1], [0, 0, 1, 1], [], []>} : vector<16x128xf32>, vector<128x384xf32>, vector<16x384xf32> -> vector<16x384xf32>
    %cst_22 = arith.constant dense<0.000000e+00> : vector<16x384xf32>
    %46 = tpu.matmul %44, %3, %cst_22 {dimension_numbers = #tpu.dot_dimension_numbers<[1], [0], [0], [1], [0, 0, 1, 1], [], []>} : vector<16x128xf32>, vector<128x384xf32>, vector<16x384xf32> -> vector<16x384xf32>
    %47 = arith.addf %45, %46 : vector<16x384xf32>
    %48 = vector.broadcast %6 : vector<1x384xf32> to vector<16x384xf32>
    %49 = arith.addf %47, %48 : vector<16x384xf32>
    %cst_23 = arith.constant dense<0.000000e+00> : vector<16x256xf32>
    %50 = tpu.matmul %41, %4, %cst_23 {dimension_numbers = #tpu.dot_dimension_numbers<[1], [0], [0], [1], [0, 0, 1, 1], [], []>} : vector<16x128xf32>, vector<128x256xf32>, vector<16x256xf32> -> vector<16x256xf32>
    %51 = vector.extract_strided_slice %49 {offsets = [0, 0], sizes = [16, 128], strides = [1, 1]} : vector<16x384xf32> to vector<16x128xf32>
    %52 = vector.extract_strided_slice %50 {offsets = [0, 0], sizes = [16, 128], strides = [1, 1]} : vector<16x256xf32> to vector<16x128xf32>
    %53 = arith.addf %51, %52 : vector<16x128xf32>
    %54 = arith.negf %53 : vector<16x128xf32>
    %55 = math.exp %54 : vector<16x128xf32>
    %cst_24 = arith.constant 1.000000e+00 : f32
    %56 = vector.broadcast %cst_24 : f32 to vector<16x128xf32>
    %57 = arith.addf %56, %55 : vector<16x128xf32>
    %58 = arith.divf %56, %57 : vector<16x128xf32>
    %59 = vector.extract_strided_slice %49 {offsets = [0, 128], sizes = [16, 128], strides = [1, 1]} : vector<16x384xf32> to vector<16x128xf32>
    %60 = vector.extract_strided_slice %50 {offsets = [0, 128], sizes = [16, 128], strides = [1, 1]} : vector<16x256xf32> to vector<16x128xf32>
    %61 = arith.addf %59, %60 : vector<16x128xf32>
    %62 = arith.negf %61 : vector<16x128xf32>
    %63 = math.exp %62 : vector<16x128xf32>
    %cst_25 = arith.constant 1.000000e+00 : f32
    %64 = vector.broadcast %cst_25 : f32 to vector<16x128xf32>
    %65 = arith.addf %64, %63 : vector<16x128xf32>
    %66 = arith.divf %64, %65 : vector<16x128xf32>
    %67 = vector.extract_strided_slice %49 {offsets = [0, 256], sizes = [16, 128], strides = [1, 1]} : vector<16x384xf32> to vector<16x128xf32>
    %68 = arith.mulf %58, %41 : vector<16x128xf32>
    %cst_26 = arith.constant dense<0.000000e+00> : vector<16x128xf32>
    %69 = tpu.matmul %68, %5, %cst_26 {dimension_numbers = #tpu.dot_dimension_numbers<[1], [0], [0], [1], [0, 0, 1, 1], [], []>} : vector<16x128xf32>, vector<128x128xf32>, vector<16x128xf32> -> vector<16x128xf32>
    %70 = arith.addf %67, %69 : vector<16x128xf32>
    %71 = math.tanh %70 : vector<16x128xf32>
    %cst_27 = arith.constant 1.000000e+00 : f32
    %72 = vector.broadcast %cst_27 : f32 to vector<16x128xf32>
    %73 = arith.subf %72, %66 : vector<16x128xf32>
    %74 = arith.mulf %73, %41 : vector<16x128xf32>
    %75 = arith.mulf %66, %71 : vector<16x128xf32>
    %76 = arith.addf %74, %75 : vector<16x128xf32>
    %cst_28 = arith.constant dense<0.000000e+00> : vector<32x128xf32>
    %77 = tpu.matmul %1, %76, %cst_28 {dimension_numbers = #tpu.dot_dimension_numbers<[1], [0], [0], [1], [0, 0, 1, 1], [], []>} : vector<32x16xf32>, vector<16x128xf32>, vector<32x128xf32> -> vector<32x128xf32>
    %78 = vector.extract_strided_slice %77 {offsets = [0, 0], sizes = [16, 128], strides = [1, 1]} : vector<32x128xf32> to vector<16x128xf32>
    %79 = vector.extract_strided_slice %77 {offsets = [16, 0], sizes = [16, 128], strides = [1, 1]} : vector<32x128xf32> to vector<16x128xf32>
    %cst_29 = arith.constant dense<0.000000e+00> : vector<16x384xf32>
    %80 = tpu.matmul %78, %2, %cst_29 {dimension_numbers = #tpu.dot_dimension_numbers<[1], [0], [0], [1], [0, 0, 1, 1], [], []>} : vector<16x128xf32>, vector<128x384xf32>, vector<16x384xf32> -> vector<16x384xf32>
    %cst_30 = arith.constant dense<0.000000e+00> : vector<16x384xf32>
    %81 = tpu.matmul %79, %3, %cst_30 {dimension_numbers = #tpu.dot_dimension_numbers<[1], [0], [0], [1], [0, 0, 1, 1], [], []>} : vector<16x128xf32>, vector<128x384xf32>, vector<16x384xf32> -> vector<16x384xf32>
    %82 = arith.addf %80, %81 : vector<16x384xf32>
    %83 = vector.broadcast %6 : vector<1x384xf32> to vector<16x384xf32>
    %84 = arith.addf %82, %83 : vector<16x384xf32>
    %cst_31 = arith.constant dense<0.000000e+00> : vector<16x256xf32>
    %85 = tpu.matmul %76, %4, %cst_31 {dimension_numbers = #tpu.dot_dimension_numbers<[1], [0], [0], [1], [0, 0, 1, 1], [], []>} : vector<16x128xf32>, vector<128x256xf32>, vector<16x256xf32> -> vector<16x256xf32>
    %86 = vector.extract_strided_slice %84 {offsets = [0, 0], sizes = [16, 128], strides = [1, 1]} : vector<16x384xf32> to vector<16x128xf32>
    %87 = vector.extract_strided_slice %85 {offsets = [0, 0], sizes = [16, 128], strides = [1, 1]} : vector<16x256xf32> to vector<16x128xf32>
    %88 = arith.addf %86, %87 : vector<16x128xf32>
    %89 = arith.negf %88 : vector<16x128xf32>
    %90 = math.exp %89 : vector<16x128xf32>
    %cst_32 = arith.constant 1.000000e+00 : f32
    %91 = vector.broadcast %cst_32 : f32 to vector<16x128xf32>
    %92 = arith.addf %91, %90 : vector<16x128xf32>
    %93 = arith.divf %91, %92 : vector<16x128xf32>
    %94 = vector.extract_strided_slice %84 {offsets = [0, 128], sizes = [16, 128], strides = [1, 1]} : vector<16x384xf32> to vector<16x128xf32>
    %95 = vector.extract_strided_slice %85 {offsets = [0, 128], sizes = [16, 128], strides = [1, 1]} : vector<16x256xf32> to vector<16x128xf32>
    %96 = arith.addf %94, %95 : vector<16x128xf32>
    %97 = arith.negf %96 : vector<16x128xf32>
    %98 = math.exp %97 : vector<16x128xf32>
    %cst_33 = arith.constant 1.000000e+00 : f32
    %99 = vector.broadcast %cst_33 : f32 to vector<16x128xf32>
    %100 = arith.addf %99, %98 : vector<16x128xf32>
    %101 = arith.divf %99, %100 : vector<16x128xf32>
    %102 = vector.extract_strided_slice %84 {offsets = [0, 256], sizes = [16, 128], strides = [1, 1]} : vector<16x384xf32> to vector<16x128xf32>
    %103 = arith.mulf %93, %76 : vector<16x128xf32>
    %cst_34 = arith.constant dense<0.000000e+00> : vector<16x128xf32>
    %104 = tpu.matmul %103, %5, %cst_34 {dimension_numbers = #tpu.dot_dimension_numbers<[1], [0], [0], [1], [0, 0, 1, 1], [], []>} : vector<16x128xf32>, vector<128x128xf32>, vector<16x128xf32> -> vector<16x128xf32>
    %105 = arith.addf %102, %104 : vector<16x128xf32>
    %106 = math.tanh %105 : vector<16x128xf32>
    %cst_35 = arith.constant 1.000000e+00 : f32
    %107 = vector.broadcast %cst_35 : f32 to vector<16x128xf32>
    %108 = arith.subf %107, %101 : vector<16x128xf32>
    %109 = arith.mulf %108, %76 : vector<16x128xf32>
    %110 = arith.mulf %101, %106 : vector<16x128xf32>
    %111 = arith.addf %109, %110 : vector<16x128xf32>
    %c0_36 = arith.constant 0 : index
    %c0_37 = arith.constant 0 : index
    %112 = vector.load %arg9[%c0_36, %c0_37] : memref<128x256xf32, #tpu.memory_space<vmem>>, vector<128x256xf32>
    %cst_38 = arith.constant dense<0.000000e+00> : vector<16x256xf32>
    %113 = tpu.matmul %111, %112, %cst_38 {dimension_numbers = #tpu.dot_dimension_numbers<[1], [0], [0], [1], [0, 0, 1, 1], [], []>} : vector<16x128xf32>, vector<128x256xf32>, vector<16x256xf32> -> vector<16x256xf32>
    %c0_39 = arith.constant 0 : index
    %c0_40 = arith.constant 0 : index
    %114 = vector.load %arg10[%c0_39, %c0_40] : memref<16x256xf32, #tpu.memory_space<vmem>>, vector<16x256xf32>
    %115 = arith.mulf %113, %114 : vector<16x256xf32>
    %c0_41 = arith.constant 0 : index
    %c0_42 = arith.constant 0 : index
    %116 = vector.load %arg11[%c0_41, %c0_42] : memref<2x16xf32, #tpu.memory_space<vmem>>, vector<2x16xf32>
    %cst_43 = arith.constant dense<0.000000e+00> : vector<2x256xf32>
    %117 = tpu.matmul %116, %115, %cst_43 {dimension_numbers = #tpu.dot_dimension_numbers<[1], [0], [0], [1], [0, 0, 1, 1], [], []>} : vector<2x16xf32>, vector<16x256xf32>, vector<2x256xf32> -> vector<2x256xf32>
    %c0_44 = arith.constant 0 : index
    %c0_45 = arith.constant 0 : index
    %118 = vector.load %arg7[%c0_44, %c0_45] : memref<256x128xf32, #tpu.memory_space<vmem>>, vector<256x128xf32>
    %cst_46 = arith.constant dense<0.000000e+00> : vector<2x128xf32>
    %119 = tpu.matmul %117, %118, %cst_46 {dimension_numbers = #tpu.dot_dimension_numbers<[1], [0], [0], [1], [0, 0, 1, 1], [], []>} : vector<2x256xf32>, vector<256x128xf32>, vector<2x128xf32> -> vector<2x128xf32>
    %c0_47 = arith.constant 0 : index
    %c0_48 = arith.constant 0 : index
    %120 = vector.load %arg8[%c0_47, %c0_48] : memref<1x128xf32, #tpu.memory_space<vmem>>, vector<1x128xf32>
    %121 = vector.broadcast %120 : vector<1x128xf32> to vector<2x128xf32>
    %122 = arith.addf %119, %121 : vector<2x128xf32>
    %123 = arith.negf %122 : vector<2x128xf32>
    %124 = math.exp %123 : vector<2x128xf32>
    %cst_49 = arith.constant 1.000000e+00 : f32
    %125 = vector.broadcast %cst_49 : f32 to vector<2x128xf32>
    %126 = arith.addf %125, %124 : vector<2x128xf32>
    %127 = arith.divf %125, %126 : vector<2x128xf32>
    %c0_50 = arith.constant 0 : index
    %c0_51 = arith.constant 0 : index
    %128 = vector.load %arg12[%c0_50, %c0_51] : memref<2x128xf32, #tpu.memory_space<vmem>>, vector<2x128xf32>
    tpu.vector_store %arg12[%c0_50, %c0_51], %127 {strides = array<i32>} : memref<2x128xf32, #tpu.memory_space<vmem>>, vector<2x128xf32>,
    return
  }
}

</mosaic_0001>

<llo_original>
// kernel: ggnn_forward.1
$region0: #{ggnn_forward.1}
  #allocation0 [shape = 'u32[]', space=smem, size = 0x4, offset = 0x4, fixed_abs, tag = 'smem constant byte address 0x4 - core index']
  #allocation1 [shape = 'u32[144,128]{1,0:T(1,128)}', space=vmem, size = 0x12000, scoped, tag = 'internal scratch']
  %s0 = inlined_call_operand.vmem [shape: f32[16,128], index: 0, kind: input, shape index: {}]
  %s1 = inlined_call_operand.vmem [shape: f32[32,16], index: 1, kind: input, shape index: {}]
  %s2 = inlined_call_operand.vmem [shape: f32[128,384], index: 2, kind: input, shape index: {}]
  %s3 = inlined_call_operand.vmem [shape: f32[128,384], index: 3, kind: input, shape index: {}]
  %s4 = inlined_call_operand.vmem [shape: f32[128,256], index: 4, kind: input, shape index: {}]
  %s5 = inlined_call_operand.vmem [shape: f32[128,128], index: 5, kind: input, shape index: {}]
  %s6 = inlined_call_operand.vmem [shape: f32[1,384], index: 6, kind: input, shape index: {}]
  %s7 = inlined_call_operand.vmem [shape: f32[256,128], index: 7, kind: input, shape index: {}]
  %s8 = inlined_call_operand.vmem [shape: f32[1,128], index: 8, kind: input, shape index: {}]
  %s9 = inlined_call_operand.vmem [shape: f32[128,256], index: 9, kind: input, shape index: {}]
  %s10 = inlined_call_operand.vmem [shape: f32[16,256], index: 10, kind: input, shape index: {}]
  %s11 = inlined_call_operand.vmem [shape: f32[2,16], index: 11, kind: input, shape index: {}]
  %s12 = inlined_call_operand.hbm [shape: f32[2,128], index: 12, kind: output, shape index: {}]
  %s13 = sld [smem:[#allocation0]]
  $region58: #{ggnn_forward.1} parent=0
    _
  %s15 = ssub.s32 1, %s13
  %s16 = scalar_select 0, %s15, %s13
  $region1: #{ggnn_forward.1} parent=0
    #allocation2 [shape = 'u8[1024]{0}', space=vmem, size = 0x400, scoped, tag = 'output window, operand 0, single buffered']
    #allocation3 [shape = 's32[1]{0}', space=sflag, size = 0x4, scoped, tag = 'scoped memory for ggnn_forward.1']
    %17 = vsyncpa [#allocation3], 0
    // Predicated region
    $region2: #{ggnn_forward.1} parent=1 // pred_check
      _
    $region3: #{ggnn_forward.1} parent=1 // pred_check_branch
      %19 = sbr.rel (0) target = $region5
    $region4: #{ggnn_forward.1} parent=1 // pred_region
      _
    $region5: #{ggnn_forward.1} parent=1 // pred_fallthru
      _
    // Predicated region
    $region6: #{ggnn_forward.1} parent=1 // pred_check
      _
    $region7: #{ggnn_forward.1} parent=1 // pred_check_branch
      %21 = sbr.rel (0) target = $region9
    $region8: #{ggnn_forward.1} parent=1 // pred_region
      _
    $region9: #{ggnn_forward.1} parent=1 // pred_fallthru
      _
    // Predicated region
    $region10: #{ggnn_forward.1} parent=1 // pred_check
      _
    $region11: #{ggnn_forward.1} parent=1 // pred_check_branch
      %23 = sbr.rel (0) target = $region13
    $region12: #{ggnn_forward.1} parent=1 // pred_region
      _
    $region13: #{ggnn_forward.1} parent=1 // pred_fallthru
      _
    // Predicated region
    $region14: #{ggnn_forward.1} parent=1 // pred_check
      _
    $region15: #{ggnn_forward.1} parent=1 // pred_check_branch
      %25 = sbr.rel (0) target = $region17
    $region16: #{ggnn_forward.1} parent=1 // pred_region
      _
    $region17: #{ggnn_forward.1} parent=1 // pred_fallthru
      _
    // Predicated region
    $region18: #{ggnn_forward.1} parent=1 // pred_check
      _
    $region19: #{ggnn_forward.1} parent=1 // pred_check_branch
      %27 = sbr.rel (0) target = $region21
    $region20: #{ggnn_forward.1} parent=1 // pred_region
      _
    $region21: #{ggnn_forward.1} parent=1 // pred_fallthru
      _
    // Predicated region
    $region22: #{ggnn_forward.1} parent=1 // pred_check
      _
    $region23: #{ggnn_forward.1} parent=1 // pred_check_branch
      %29 = sbr.rel (0) target = $region25
    $region24: #{ggnn_forward.1} parent=1 // pred_region
      _
    $region25: #{ggnn_forward.1} parent=1 // pred_fallthru
      _
    // Predicated region
    $region26: #{ggnn_forward.1} parent=1 // pred_check
      _
    $region27: #{ggnn_forward.1} parent=1 // pred_check_branch
      %31 = sbr.rel (0) target = $region29
    $region28: #{ggnn_forward.1} parent=1 // pred_region
      _
    $region29: #{ggnn_forward.1} parent=1 // pred_fallthru
      _
    // Predicated region
    $region30: #{ggnn_forward.1} parent=1 // pred_check
      _
    $region31: #{ggnn_forward.1} parent=1 // pred_check_branch
      %33 = sbr.rel (0) target = $region33
    $region32: #{ggnn_forward.1} parent=1 // pred_region
      _
    $region33: #{ggnn_forward.1} parent=1 // pred_fallthru
      _
    // Predicated region
    $region34: #{ggnn_forward.1} parent=1 // pred_check
      _
    $region35: #{ggnn_forward.1} parent=1 // pred_check_branch
      %35 = sbr.rel (0) target = $region37
    $region36: #{ggnn_forward.1} parent=1 // pred_region
      _
    $region37: #{ggnn_forward.1} parent=1 // pred_fallthru
      _
    // Predicated region
    $region38: #{ggnn_forward.1} parent=1 // pred_check
      _
    $region39: #{ggnn_forward.1} parent=1 // pred_check_branch
      %37 = sbr.rel (0) target = $region41
    $region40: #{ggnn_forward.1} parent=1 // pred_region
      _
    $region41: #{ggnn_forward.1} parent=1 // pred_fallthru
      _
    // Predicated region
    $region42: #{ggnn_forward.1} parent=1 // pred_check
      _
    $region43: #{ggnn_forward.1} parent=1 // pred_check_branch
      %39 = sbr.rel (0) target = $region45
    $region44: #{ggnn_forward.1} parent=1 // pred_region
      _
    $region45: #{ggnn_forward.1} parent=1 // pred_fallthru
      _
    // Predicated region
    $region46: #{ggnn_forward.1} parent=1 // pred_check
      _
    $region47: #{ggnn_forward.1} parent=1 // pred_check_branch
      %41 = sbr.rel (0) target = $region49
    $region48: #{ggnn_forward.1} parent=1 // pred_region
      _
    $region49: #{ggnn_forward.1} parent=1 // pred_fallthru
      _
    %v42 = vld [vmem:[%s0] sm:$0xff]
    %v43 = vld [vmem:[%s0 + $0x8] sm:$0xff]
    %v44 = vld [vmem:[%s1] sm:$0xff]
    %v45 = vld [vmem:[%s1 + $0x8] sm:$0xff]
    %v46 = vld [vmem:[%s1 + $0x10] sm:$0xff]
    %v47 = vld [vmem:[%s1 + $0x18] sm:$0xff]
    %v48 = vld [vmem:[%s2] sm:$0xff]
    %v49 = vld [vmem:[%s2 + $0x8] sm:$0xff]
    %v50 = vld [vmem:[%s2 + $0x10] sm:$0xff]
    %v51 = vld [vmem:[%s2 + $0x18] sm:$0xff]
    %v52 = vld [vmem:[%s2 + $0x20] sm:$0xff]
    %v53 = vld [vmem:[%s2 + $0x28] sm:$0xff]
    %v54 = vld [vmem:[%s2 + $0x30] sm:$0xff]
    %v55 = vld [vmem:[%s2 + $0x38] sm:$0xff]
    %v56 = vld [vmem:[%s2 + $0x40] sm:$0xff]
    %v57 = vld [vmem:[%s2 + $0x48] sm:$0xff]
    %v58 = vld [vmem:[%s2 + $0x50] sm:$0xff]
    %v59 = vld [vmem:[%s2 + $0x58] sm:$0xff]
    %v60 = vld [vmem:[%s2 + $0x60] sm:$0xff]
    %v61 = vld [vmem:[%s2 + $0x68] sm:$0xff]
    %v62 = vld [vmem:[%s2 + $0x70] sm:$0xff]
    %v63 = vld [vmem:[%s2 + $0x78] sm:$0xff]
    %v64 = vld [vmem:[%s2 + $0x80] sm:$0xff]
    %v65 = vld [vmem:[%s2 + $0x88] sm:$0xff]
    %v66 = vld [vmem:[%s2 + $0x90] sm:$0xff]
    %v67 = vld [vmem:[%s2 + $0x98] sm:$0xff]
    %v68 = vld [vmem:[%s2 + $0xa0] sm:$0xff]
    %v69 = vld [vmem:[%s2 + $0xa8] sm:$0xff]
    %v70 = vld [vmem:[%s2 + $0xb0] sm:$0xff]
    %v71 = vld [vmem:[%s2 + $0xb8] sm:$0xff]
    %v72 = vld [vmem:[%s2 + $0xc0] sm:$0xff]
    %v73 = vld [vmem:[%s2 + $0xc8] sm:$0xff]
    %v74 = vld [vmem:[%s2 + $0xd0] sm:$0xff]
    %v75 = vld [vmem:[%s2 + $0xd8] sm:$0xff]
    %v76 = vld [vmem:[%s2 + $0xe0] sm:$0xff]
    %v77 = vld [vmem:[%s2 + $0xe8] sm:$0xff]
    %v78 = vld [vmem:[%s2 + $0xf0] sm:$0xff]
    %v79 = vld [vmem:[%s2 + $0xf8] sm:$0xff]
    %v80 = vld [vmem:[%s2 + $0x100] sm:$0xff]
    %v81 = vld [vmem:[%s2 + $0x108] sm:$0xff]
    %v82 = vld [vmem:[%s2 + $0x110] sm:$0xff]
    %v83 = vld [vmem:[%s2 + $0x118] sm:$0xff]
    %v84 = vld [vmem:[%s2 + $0x120] sm:$0xff]
    %v85 = vld [vmem:[%s2 + $0x128] sm:$0xff]
    %v86 = vld [vmem:[%s2 + $0x130] sm:$0xff]
    %v87 = vld [vmem:[%s2 + $0x138] sm:$0xff]
    %v88 = vld [vmem:[%s2 + $0x140] sm:$0xff]
    %v89 = vld [vmem:[%s2 + $0x148] sm:$0xff]
    %v90 = vld [vmem:[%s2 + $0x150] sm:$0xff]
    %v91 = vld [vmem:[%s2 + $0x158] sm:$0xff]
    %v92 = vld [vmem:[%s2 + $0x160] sm:$0xff]
    %v93 = vld [vmem:[%s2 + $0x168] sm:$0xff]
    %v94 = vld [vmem:[%s2 + $0x170] sm:$0xff]
    %v95 = vld [vmem:[%s2 + $0x178] sm:$0xff]
    %v96 = vld [vmem:[%s3] sm:$0xff]
    %v97 = vld [vmem:[%s3 + $0x8] sm:$0xff]
    %v98 = vld [vmem:[%s3 + $0x10] sm:$0xff]
    %v99 = vld [vmem:[%s3 + $0x18] sm:$0xff]
    %v100 = vld [vmem:[%s3 + $0x20] sm:$0xff]
    %v101 = vld [vmem:[%s3 + $0x28] sm:$0xff]
    %v102 = vld [vmem:[%s3 + $0x30] sm:$0xff]
    %v103 = vld [vmem:[%s3 + $0x38] sm:$0xff]
    %v104 = vld [vmem:[%s3 + $0x40] sm:$0xff]
    %v105 = vld [vmem:[%s3 + $0x48] sm:$0xff]
    %v106 = vld [vmem:[%s3 + $0x50] sm:$0xff]
    %v107 = vld [vmem:[%s3 + $0x58] sm:$0xff]
    %v108 = vld [vmem:[%s3 + $0x60] sm:$0xff]
    %v109 = vld [vmem:[%s3 + $0x68] sm:$0xff]
    %v110 = vld [vmem:[%s3 + $0x70] sm:$0xff]
    %v111 = vld [vmem:[%s3 + $0x78] sm:$0xff]
    %v112 = vld [vmem:[%s3 + $0x80] sm:$0xff]
    %v113 = vld [vmem:[%s3 + $0x88] sm:$0xff]
    %v114 = vld [vmem:[%s3 + $0x90] sm:$0xff]
    %v115 = vld [vmem:[%s3 + $0x98] sm:$0xff]
    %v116 = vld [vmem:[%s3 + $0xa0] sm:$0xff]
    %v117 = vld [vmem:[%s3 + $0xa8] sm:$0xff]
    %v118 = vld [vmem:[%s3 + $0xb0] sm:$0xff]
    %v119 = vld [vmem:[%s3 + $0xb8] sm:$0xff]
    %v120 = vld [vmem:[%s3 + $0xc0] sm:$0xff]
    %v121 = vld [vmem:[%s3 + $0xc8] sm:$0xff]
    %v122 = vld [vmem:[%s3 + $0xd0] sm:$0xff]
    %v123 = vld [vmem:[%s3 + $0xd8] sm:$0xff]
    %v124 = vld [vmem:[%s3 + $0xe0] sm:$0xff]
    %v125 = vld [vmem:[%s3 + $0xe8] sm:$0xff]
    %v126 = vld [vmem:[%s3 + $0xf0] sm:$0xff]
    %v127 = vld [vmem:[%s3 + $0xf8] sm:$0xff]
    %v128 = vld [vmem:[%s3 + $0x100] sm:$0xff]
    %v129 = vld [vmem:[%s3 + $0x108] sm:$0xff]
    %v130 = vld [vmem:[%s3 + $0x110] sm:$0xff]
    %v131 = vld [vmem:[%s3 + $0x118] sm:$0xff]
    %v132 = vld [vmem:[%s3 + $0x120] sm:$0xff]
    %v133 = vld [vmem:[%s3 + $0x128] sm:$0xff]
    %v134 = vld [vmem:[%s3 + $0x130] sm:$0xff]
    %v135 = vld [vmem:[%s3 + $0x138] sm:$0xff]
    %v136 = vld [vmem:[%s3 + $0x140] sm:$0xff]
    %v137 = vld [vmem:[%s3 + $0x148] sm:$0xff]
    %v138 = vld [vmem:[%s3 + $0x150] sm:$0xff]
    %v139 = vld [vmem:[%s3 + $0x158] sm:$0xff]
    %v140 = vld [vmem:[%s3 + $0x160] sm:$0xff]
    %v141 = vld [vmem:[%s3 + $0x168] sm:$0xff]
    %v142 = vld [vmem:[%s3 + $0x170] sm:$0xff]
    %v143 = vld [vmem:[%s3 + $0x178] sm:$0xff]
    %v144 = vld [vmem:[%s4] sm:$0xff]
    %v145 = vld [vmem:[%s4 + $0x8] sm:$0xff]
    %v146 = vld [vmem:[%s4 + $0x10] sm:$0xff]
    %v147 = vld [vmem:[%s4 + $0x18] sm:$0xff]
    %v148 = vld [vmem:[%s4 + $0x20] sm:$0xff]
    %v149 = vld [vmem:[%s4 + $0x28] sm:$0xff]
    %v150 = vld [vmem:[%s4 + $0x30] sm:$0xff]
    %v151 = vld [vmem:[%s4 + $0x38] sm:$0xff]
    %v152 = vld [vmem:[%s4 + $0x40] sm:$0xff]
    %v153 = vld [vmem:[%s4 + $0x48] sm:$0xff]
    %v154 = vld [vmem:[%s4 + $0x50] sm:$0xff]
    %v155 = vld [vmem:[%s4 + $0x58] sm:$0xff]
    %v156 = vld [vmem:[%s4 + $0x60] sm:$0xff]
    %v157 = vld [vmem:[%s4 + $0x68] sm:$0xff]
    %v158 = vld [vmem:[%s4 + $0x70] sm:$0xff]
    %v159 = vld [vmem:[%s4 + $0x78] sm:$0xff]
    %v160 = vld [vmem:[%s4 + $0x80] sm:$0xff]
    %v161 = vld [vmem:[%s4 + $0x88] sm:$0xff]
    %v162 = vld [vmem:[%s4 + $0x90] sm:$0xff]
    %v163 = vld [vmem:[%s4 + $0x98] sm:$0xff]
    %v164 = vld [vmem:[%s4 + $0xa0] sm:$0xff]
    %v165 = vld [vmem:[%s4 + $0xa8] sm:$0xff]
    %v166 = vld [vmem:[%s4 + $0xb0] sm:$0xff]
    %v167 = vld [vmem:[%s4 + $0xb8] sm:$0xff]
    %v168 = vld [vmem:[%s4 + $0xc0] sm:$0xff]
    %v169 = vld [vmem:[%s4 + $0xc8] sm:$0xff]
    %v170 = vld [vmem:[%s4 + $0xd0] sm:$0xff]
    %v171 = vld [vmem:[%s4 + $0xd8] sm:$0xff]
    %v172 = vld [vmem:[%s4 + $0xe0] sm:$0xff]
    %v173 = vld [vmem:[%s4 + $0xe8] sm:$0xff]
    %v174 = vld [vmem:[%s4 + $0xf0] sm:$0xff]
    %v175 = vld [vmem:[%s4 + $0xf8] sm:$0xff]
    %v176 = vld [vmem:[%s5] sm:$0xff]
    %v177 = vld [vmem:[%s5 + $0x8] sm:$0xff]
    %v178 = vld [vmem:[%s5 + $0x10] sm:$0xff]
    %v179 = vld [vmem:[%s5 + $0x18] sm:$0xff]
    %v180 = vld [vmem:[%s5 + $0x20] sm:$0xff]
    %v181 = vld [vmem:[%s5 + $0x28] sm:$0xff]
    %v182 = vld [vmem:[%s5 + $0x30] sm:$0xff]
    %v183 = vld [vmem:[%s5 + $0x38] sm:$0xff]
    %v184 = vld [vmem:[%s5 + $0x40] sm:$0xff]
    %v185 = vld [vmem:[%s5 + $0x48] sm:$0xff]
    %v186 = vld [vmem:[%s5 + $0x50] sm:$0xff]
    %v187 = vld [vmem:[%s5 + $0x58] sm:$0xff]
    %v188 = vld [vmem:[%s5 + $0x60] sm:$0xff]
    %v189 = vld [vmem:[%s5 + $0x68] sm:$0xff]
    %v190 = vld [vmem:[%s5 + $0x70] sm:$0xff]
    %v191 = vld [vmem:[%s5 + $0x78] sm:$0xff]
    %v192 = vld [vmem:[%s6] sm:$0x7]
    %vm193 = vcmask 130048
    %v195 = vsel %vm193, %v44, 0
    %v198 = vsel %vm193, %v45, 0
    %v201 = vsel %vm193, %v46, 0
    %v204 = vsel %vm193, %v47, 0
    %206 = vmatprep.subr.mxu0 0.0
    %207 = vmatpush1.msra.mxu0 %v42
    %208 = vmatprep.subr.mxu0 0.0
    %209 = vmatpush1.msra.mxu0 %v43
    %210 = vmatprep.subr.mxu0 0.0
    %211 = vmatpush1.msra.mxu0 0.0
    %212 = vmatprep.subr.mxu0 0.0
    %213 = vmatpush1.msra.mxu0 0.0
    %214 = vmatprep.subr.mxu0 0.0
    %215 = vmatpush1.msra.mxu0 0.0
    %216 = vmatprep.subr.mxu0 0.0
    %217 = vmatpush1.msra.mxu0 0.0
    %218 = vmatprep.subr.mxu0 0.0
    %219 = vmatpush1.msra.mxu0 0.0
    %220 = vmatprep.subr.mxu0 0.0
    %221 = vmatpush1.msra.mxu0 0.0
    %222 = vmatprep.subr.mxu0 0.0
    %223 = vmatpush1.msra.mxu0 0.0
    %224 = vmatprep.subr.mxu0 0.0
    %225 = vmatpush1.msra.mxu0 0.0
    %226 = vmatprep.subr.mxu0 0.0
    %227 = vmatpush1.msra.mxu0 0.0
    %228 = vmatprep.subr.mxu0 0.0
    %229 = vmatpush1.msra.mxu0 0.0
    %230 = vmatprep.subr.mxu0 0.0
    %231 = vmatpush1.msra.mxu0 0.0
    %232 = vmatprep.subr.mxu0 0.0
    %233 = vmatpush1.msra.mxu0 0.0
    %234 = vmatprep.subr.mxu0 0.0
    %235 = vmatpush1.msra.mxu0 0.0
    %236 = vmatprep.subr.mxu0 0.0
    %237 = vmatpush1.msra.mxu0 0.0
    %238 = vmatprep.subr.mxu0 0.0
    %239 = vmatpush1.msra.mxu0 0.0
    %240 = vmatprep.subr.mxu0 0.0
    %241 = vmatpush1.msra.mxu0 0.0
    %242 = vmatprep.subr.mxu0 0.0
    %243 = vmatpush1.msra.mxu0 0.0
    %244 = vmatprep.subr.mxu0 0.0
    %245 = vmatpush1.msra.mxu0 0.0
    %246 = vmatprep.subr.mxu0 0.0
    %247 = vmatpush1.msra.mxu0 0.0
    %248 = vmatprep.subr.mxu0 0.0
    %249 = vmatpush1.msra.mxu0 0.0
    %250 = vmatprep.subr.mxu0 0.0
    %251 = vmatpush1.msra.mxu0 0.0
    %252 = vmatprep.subr.mxu0 0.0
    %253 = vmatpush1.msra.mxu0 0.0
    %254 = vmatprep.subr.mxu0 0.0
    %255 = vmatpush1.msra.mxu0 0.0
    %256 = vmatprep.subr.mxu0 0.0
    %257 = vmatpush1.msra.mxu0 0.0
    %258 = vmatprep.subr.mxu0 0.0
    %259 = vmatpush1.msra.mxu0 0.0
    %260 = vmatprep.subr.mxu0 0.0
    %261 = vmatpush1.msra.mxu0 0.0
    %262 = vmatprep.subr.mxu0 0.0
    %263 = vmatpush1.msra.mxu0 0.0
    %264 = vmatprep.subr.mxu0 0.0
    %265 = vmatpush1.msra.mxu0 0.0
    %266 = vmatprep.subr.mxu0 0.0
    %267 = vmatpush1.msra.mxu0 0.0
    %268 = vmatprep.subr.mxu0 0.0
    %269 = vmatpush1.msra.mxu0 0.0
    %270 = vmatprep.mubr.f32.mxu0 0.0
    %271 = vmatmul.mubr.f32.gmra.mrb[0].mxu0 %v195
    %v272 = vpop.f32.mrb[0].mxu0
    %v273 = vadd.f32 0.0, %v272
    %v274 = vpop.f32.mrb[0].mxu0
    %275 = vmatprep.mubr.f32.mxu0 0.0
    %276 = vmatmul.mubr.f32.gmra.mrb[0].mxu0 %v198
    %v277 = vpop.f32.mrb[0].mxu0
    %v278 = vadd.f32 0.0, %v277
    %v279 = vpop.f32.mrb[0].mxu0
    %280 = vmatprep.mubr.f32.mxu0 0.0
    %281 = vmatmul.mubr.f32.gmra.mrb[0].mxu0 %v201
    %v282 = vpop.f32.mrb[0].mxu0
    %v283 = vadd.f32 0.0, %v282
    %v284 = vpop.f32.mrb[0].mxu0
    %285 = vmatprep.mubr.f32.mxu0 0.0
    %286 = vmatmul.mubr.f32.gmra.mrb[0].mxu0 %v204
    %v287 = vpop.f32.mrb[0].mxu0
    %v288 = vadd.f32 0.0, %v287
    %v289 = vpop.f32.mrb[0].mxu0
    %290 = vdwg.mxu0
    %291 = vmatprep.subr.mxu0 %v97
    %292 = vmatpush1.msra.mxu0 %v96
    %293 = vmatprep.subr.mxu0 %v100
    %294 = vmatpush1.msra.mxu0 %v99
    %295 = vmatprep.subr.mxu0 %v103
    %296 = vmatpush1.msra.mxu0 %v102
    %297 = vmatprep.subr.mxu0 %v106
    %298 = vmatpush1.msra.mxu0 %v105
    %299 = vmatprep.subr.mxu0 %v109
    %300 = vmatpush1.msra.mxu0 %v108
    %301 = vmatprep.subr.mxu0 %v112
    %302 = vmatpush1.msra.mxu0 %v111
    %303 = vmatprep.subr.mxu0 %v115
    %304 = vmatpush1.msra.mxu0 %v114
    %305 = vmatprep.subr.mxu0 %v118
    %306 = vmatpush1.msra.mxu0 %v117
    %307 = vmatprep.subr.mxu0 %v121
    %308 = vmatpush1.msra.mxu0 %v120
    %309 = vmatprep.subr.mxu0 %v124
    %310 = vmatpush1.msra.mxu0 %v123
    %311 = vmatprep.subr.mxu0 %v127
    %312 = vmatpush1.msra.mxu0 %v126
    %313 = vmatprep.subr.mxu0 %v130
    %314 = vmatpush1.msra.mxu0 %v129
    %315 = vmatprep.subr.mxu0 %v133
    %316 = vmatpush1.msra.mxu0 %v132
    %317 = vmatprep.subr.mxu0 %v136
    %318 = vmatpush1.msra.mxu0 %v135
    %319 = vmatprep.subr.mxu0 %v139
    %320 = vmatpush1.msra.mxu0 %v138
    %321 = vmatprep.subr.mxu0 %v142
    %322 = vmatpush1.msra.mxu0 %v141
    %323 = vmatprep.subr.mxu0 0.0
    %324 = vmatpush1.msra.mxu0 0.0
    %325 = vmatprep.subr.mxu0 0.0
    %326 = vmatpush1.msra.mxu0 0.0
    %327 = vmatprep.subr.mxu0 0.0
    %328 = vmatpush1.msra.mxu0 0.0
    %329 = vmatprep.subr.mxu0 0.0
    %330 = vmatpush1.msra.mxu0 0.0
    %331 = vmatprep.subr.mxu0 0.0
    %332 = vmatpush1.msra.mxu0 0.0
    %333 = vmatprep.subr.mxu0 0.0
    %334 = vmatpush1.msra.mxu0 0.0
    %335 = vmatprep.subr.mxu0 0.0
    %336 = vmatpush1.msra.mxu0 0.0
    %337 = vmatprep.subr.mxu0 0.0
    %338 = vmatpush1.msra.mxu0 0.0
    %339 = vmatprep.subr.mxu0 0.0
    %340 = vmatpush1.msra.mxu0 0.0
    %341 = vmatprep.subr.mxu0 0.0
    %342 = vmatpush1.msra.mxu0 0.0
    %343 = vmatprep.subr.mxu0 0.0
    %344 = vmatpush1.msra.mxu0 0.0
    %345 = vmatprep.subr.mxu0 0.0
    %346 = vmatpush1.msra.mxu0 0.0
    %347 = vmatprep.subr.mxu0 0.0
    %348 = vmatpush1.msra.mxu0 0.0
    %349 = vmatprep.subr.mxu0 0.0
    %350 = vmatpush1.msra.mxu0 0.0
    %351 = vmatprep.subr.mxu0 0.0
    %352 = vmatpush1.msra.mxu0 0.0
    %353 = vmatprep.subr.mxu0 0.0
    %354 = vmatpush1.msra.mxu0 0.0
    %355 = vmatprep.mubr.f32.mxu0 0.0
    %356 = vmatmul.mubr.f32.gmra.mrb[0].mxu0 %v283
    %v357 = vpop.f32.mrb[0].mxu0
    %v358 = vadd.f32 0.0, %v357
    %v359 = vpop.f32.mrb[0].mxu0
    %v360 = vadd.f32 0.0, %v359
    %361 = vmatprep.mubr.f32.mxu0 0.0
    %362 = vmatmul.mubr.f32.gmra.mrb[0].mxu0 %v288
    %v363 = vpop.f32.mrb[0].mxu0
    %v364 = vadd.f32 0.0, %v363
    %v365 = vpop.f32.mrb[0].mxu0
    %v366 = vadd.f32 0.0, %v365
    %367 = vdwg.mxu0
    %368 = vmatprep.subr.mxu0 0.0
    %369 = vmatpush1.msra.mxu0 %v98
    %370 = vmatprep.subr.mxu0 0.0
    %371 = vmatpush1.msra.mxu0 %v101
    %372 = vmatprep.subr.mxu0 0.0
    %373 = vmatpush1.msra.mxu0 %v104
    %374 = vmatprep.subr.mxu0 0.0
    %375 = vmatpush1.msra.mxu0 %v107
    %376 = vmatprep.subr.mxu0 0.0
    %377 = vmatpush1.msra.mxu0 %v110
    %378 = vmatprep.subr.mxu0 0.0
    %379 = vmatpush1.msra.mxu0 %v113
    %380 = vmatprep.subr.mxu0 0.0
    %381 = vmatpush1.msra.mxu0 %v116
    %382 = vmatprep.subr.mxu0 0.0
    %383 = vmatpush1.msra.mxu0 %v119
    %384 = vmatprep.subr.mxu0 0.0
    %385 = vmatpush1.msra.mxu0 %v122
    %386 = vmatprep.subr.mxu0 0.0
    %387 = vmatpush1.msra.mxu0 %v125
    %388 = vmatprep.subr.mxu0 0.0
    %389 = vmatpush1.msra.mxu0 %v128
    %390 = vmatprep.subr.mxu0 0.0
    %391 = vmatpush1.msra.mxu0 %v131
    %392 = vmatprep.subr.mxu0 0.0
    %393 = vmatpush1.msra.mxu0 %v134
    %394 = vmatprep.subr.mxu0 0.0
    %395 = vmatpush1.msra.mxu0 %v137
    %396 = vmatprep.subr.mxu0 0.0
    %397 = vmatpush1.msra.mxu0 %v140
    %398 = vmatprep.subr.mxu0 0.0
    %399 = vmatpush1.msra.mxu0 %v143
    %400 = vmatprep.subr.mxu0 0.0
    %401 = vmatpush1.msra.mxu0 0.0
    %402 = vmatprep.subr.mxu0 0.0
    %403 = vmatpush1.msra.mxu0 0.0
    %404 = vmatprep.subr.mxu0 0.0
    %405 = vmatpush1.msra.mxu0 0.0
    %406 = vmatprep.subr.mxu0 0.0
    %407 = vmatpush1.msra.mxu0 0.0
    %408 = vmatprep.subr.mxu0 0.0
    %409 = vmatpush1.msra.mxu0 0.0
    %410 = vmatprep.subr.mxu0 0.0
    %411 = vmatpush1.msra.mxu0 0.0
    %412 = vmatprep.subr.mxu0 0.0
    %413 = vmatpush1.msra.mxu0 0.0
    %414 = vmatprep.subr.mxu0 0.0
    %415 = vmatpush1.msra.mxu0 0.0
    %416 = vmatprep.subr.mxu0 0.0
    %417 = vmatpush1.msra.mxu0 0.0
    %418 = vmatprep.subr.mxu0 0.0
    %419 = vmatpush1.msra.mxu0 0.0
    %420 = vmatprep.subr.mxu0 0.0
    %421 = vmatpush1.msra.mxu0 0.0
    %422 = vmatprep.subr.mxu0 0.0
    %423 = vmatpush1.msra.mxu0 0.0
    %424 = vmatprep.subr.mxu0 0.0
    %425 = vmatpush1.msra.mxu0 0.0
    %426 = vmatprep.subr.mxu0 0.0
    %427 = vmatpush1.msra.mxu0 0.0
    %428 = vmatprep.subr.mxu0 0.0
    %429 = vmatpush1.msra.mxu0 0.0
    %430 = vmatprep.subr.mxu0 0.0
    %431 = vmatpush1.msra.mxu0 0.0
    %432 = vmatprep.mubr.f32.mxu0 0.0
    %433 = vmatmul.mubr.f32.gmra.mrb[0].mxu0 %v283
    %v434 = vpop.f32.mrb[0].mxu0
    %v435 = vadd.f32 0.0, %v434
    %v436 = vpop.f32.mrb[0].mxu0
    %437 = vmatprep.mubr.f32.mxu0 0.0
    %438 = vmatmul.mubr.f32.gmra.mrb[0].mxu0 %v288
    %v439 = vpop.f32.mrb[0].mxu0
    %v440 = vadd.f32 0.0, %v439
    %v441 = vpop.f32.mrb[0].mxu0
    %442 = vdwg.mxu0
    %443 = vmatprep.subr.mxu0 %v49
    %444 = vmatpush1.msra.mxu0 %v48
    %445 = vmatprep.subr.mxu0 %v52
    %446 = vmatpush1.msra.mxu0 %v51
    %447 = vmatprep.subr.mxu0 %v55
    %448 = vmatpush1.msra.mxu0 %v54
    %449 = vmatprep.subr.mxu0 %v58
    %450 = vmatpush1.msra.mxu0 %v57
    %451 = vmatprep.subr.mxu0 %v61
    %452 = vmatpush1.msra.mxu0 %v60
    %453 = vmatprep.subr.mxu0 %v64
    %454 = vmatpush1.msra.mxu0 %v63
    %455 = vmatprep.subr.mxu0 %v67
    %456 = vmatpush1.msra.mxu0 %v66
    %457 = vmatprep.subr.mxu0 %v70
    %458 = vmatpush1.msra.mxu0 %v69
    %459 = vmatprep.subr.mxu0 %v73
    %460 = vmatpush1.msra.mxu0 %v72
    %461 = vmatprep.subr.mxu0 %v76
    %462 = vmatpush1.msra.mxu0 %v75
    %463 = vmatprep.subr.mxu0 %v79
    %464 = vmatpush1.msra.mxu0 %v78
    %465 = vmatprep.subr.mxu0 %v82
    %466 = vmatpush1.msra.mxu0 %v81
    %467 = vmatprep.subr.mxu0 %v85
    %468 = vmatpush1.msra.mxu0 %v84
    %469 = vmatprep.subr.mxu0 %v88
    %470 = vmatpush1.msra.mxu0 %v87
    %471 = vmatprep.subr.mxu0 %v91
    %472 = vmatpush1.msra.mxu0 %v90
    %473 = vmatprep.subr.mxu0 %v94
    %474 = vmatpush1.msra.mxu0 %v93
    %475 = vmatprep.subr.mxu0 0.0
    %476 = vmatpush1.msra.mxu0 0.0
    %477 = vmatprep.subr.mxu0 0.0
    %478 = vmatpush1.msra.mxu0 0.0
    %479 = vmatprep.subr.mxu0 0.0
    %480 = vmatpush1.msra.mxu0 0.0
    %481 = vmatprep.subr.mxu0 0.0
    %482 = vmatpush1.msra.mxu0 0.0
    %483 = vmatprep.subr.mxu0 0.0
    %484 = vmatpush1.msra.mxu0 0.0
    %485 = vmatprep.subr.mxu0 0.0
    %486 = vmatpush1.msra.mxu0 0.0
    %487 = vmatprep.subr.mxu0 0.0
    %488 = vmatpush1.msra.mxu0 0.0
    %489 = vmatprep.subr.mxu0 0.0
    %490 = vmatpush1.msra.mxu0 0.0
    %491 = vmatprep.subr.mxu0 0.0
    %492 = vmatpush1.msra.mxu0 0.0
    %493 = vmatprep.subr.mxu0 0.0
    %494 = vmatpush1.msra.mxu0 0.0
    %495 = vmatprep.subr.mxu0 0.0
    %496 = vmatpush1.msra.mxu0 0.0
    %497 = vmatprep.subr.mxu0 0.0
    %498 = vmatpush1.msra.mxu0 0.0
    %499 = vmatprep.subr.mxu0 0.0
    %500 = vmatpush1.msra.mxu0 0.0
    %501 = vmatprep.subr.mxu0 0.0
    %502 = vmatpush1.msra.mxu0 0.0
    %503 = vmatprep.subr.mxu0 0.0
    %504 = vmatpush1.msra.mxu0 0.0
    %505 = vmatprep.subr.mxu0 0.0
    %506 = vmatpush1.msra.mxu0 0.0
    %507 = vmatprep.mubr.f32.mxu0 0.0
    %508 = vmatmul.mubr.f32.gmra.mrb[0].mxu0 %v273
    %v509 = vpop.f32.mrb[0].mxu0
    %v510 = vadd.f32 %v358, %v509
    %v511 = vpop.f32.mrb[0].mxu0
    %v512 = vadd.f32 %v360, %v511
    %513 = vmatprep.mubr.f32.mxu0 0.0
    %514 = vmatmul.mubr.f32.gmra.mrb[0].mxu0 %v278
    %v515 = vpop.f32.mrb[0].mxu0
    %v516 = vadd.f32 %v364, %v515
    %v517 = vpop.f32.mrb[0].mxu0
    %v518 = vadd.f32 %v366, %v517
    %519 = vdwg.mxu0
    %520 = vmatprep.subr.mxu0 0.0
    %521 = vmatpush1.msra.mxu0 %v50
    %522 = vmatprep.subr.mxu0 0.0
    %523 = vmatpush1.msra.mxu0 %v53
    %524 = vmatprep.subr.mxu0 0.0
    %525 = vmatpush1.msra.mxu0 %v56
    %526 = vmatprep.subr.mxu0 0.0
    %527 = vmatpush1.msra.mxu0 %v59
    %528 = vmatprep.subr.mxu0 0.0
    %529 = vmatpush1.msra.mxu0 %v62
    %530 = vmatprep.subr.mxu0 0.0
    %531 = vmatpush1.msra.mxu0 %v65
    %532 = vmatprep.subr.mxu0 0.0
    %533 = vmatpush1.msra.mxu0 %v68
    %534 = vmatprep.subr.mxu0 0.0
    %535 = vmatpush1.msra.mxu0 %v71
    %536 = vmatprep.subr.mxu0 0.0
    %537 = vmatpush1.msra.mxu0 %v74
    %538 = vmatprep.subr.mxu0 0.0
    %539 = vmatpush1.msra.mxu0 %v77
    %540 = vmatprep.subr.mxu0 0.0
    %541 = vmatpush1.msra.mxu0 %v80
    %542 = vmatprep.subr.mxu0 0.0
    %543 = vmatpush1.msra.mxu0 %v83
    %544 = vmatprep.subr.mxu0 0.0
    %545 = vmatpush1.msra.mxu0 %v86
    %546 = vmatprep.subr.mxu0 0.0
    %547 = vmatpush1.msra.mxu0 %v89
    %548 = vmatprep.subr.mxu0 0.0
    %549 = vmatpush1.msra.mxu0 %v92
    %550 = vmatprep.subr.mxu0 0.0
    %551 = vmatpush1.msra.mxu0 %v95
    %552 = vmatprep.subr.mxu0 0.0
    %553 = vmatpush1.msra.mxu0 0.0
    %554 = vmatprep.subr.mxu0 0.0
    %555 = vmatpush1.msra.mxu0 0.0
    %556 = vmatprep.subr.mxu0 0.0
    %557 = vmatpush1.msra.mxu0 0.0
    %558 = vmatprep.subr.mxu0 0.0
    %559 = vmatpush1.msra.mxu0 0.0
    %560 = vmatprep.subr.mxu0 0.0
    %561 = vmatpush1.msra.mxu0 0.0
    %562 = vmatprep.subr.mxu0 0.0
    %563 = vmatpush1.msra.mxu0 0.0
    %564 = vmatprep.subr.mxu0 0.0
    %565 = vmatpush1.msra.mxu0 0.0
    %566 = vmatprep.subr.mxu0 0.0
    %567 = vmatpush1.msra.mxu0 0.0
    %568 = vmatprep.subr.mxu0 0.0
    %569 = vmatpush1.msra.mxu0 0.0
    %570 = vmatprep.subr.mxu0 0.0
    %571 = vmatpush1.msra.mxu0 0.0
    %572 = vmatprep.subr.mxu0 0.0
    %573 = vmatpush1.msra.mxu0 0.0
    %574 = vmatprep.subr.mxu0 0.0
    %575 = vmatpush1.msra.mxu0 0.0
    %576 = vmatprep.subr.mxu0 0.0
    %577 = vmatpush1.msra.mxu0 0.0
    %578 = vmatprep.subr.mxu0 0.0
    %579 = vmatpush1.msra.mxu0 0.0
    %580 = vmatprep.subr.mxu0 0.0
    %581 = vmatpush1.msra.mxu0 0.0
    %582 = vmatprep.subr.mxu0 0.0
    %583 = vmatpush1.msra.mxu0 0.0
    %584 = vmatprep.mubr.f32.mxu0 0.0
    %585 = vmatmul.mubr.f32.gmra.mrb[0].mxu0 %v273
    %v586 = vpop.f32.mrb[0].mxu0
    %v587 = vadd.f32 %v435, %v586
    %v588 = vpop.f32.mrb[0].mxu0
    %589 = vmatprep.mubr.f32.mxu0 0.0
    %590 = vmatmul.mubr.f32.gmra.mrb[0].mxu0 %v278
    %v591 = vpop.f32.mrb[0].mxu0
    %v592 = vadd.f32 %v440, %v591
    %v593 = vpop.f32.mrb[0].mxu0
    %594 = vdwg.mxu0
    %v596 = vlaneseq
    %v597 = vshrl.u32 %v596, 7
    %v598 = vsub.s32 0, %v597
    %v599 = vrot.slane %v192, %v598
    %v600 = vlaneseq
    %v601 = vshrl.u32 %v600, 7
    %v602 = vsub.s32 1, %v601
    %v603 = vrot.slane %v192, %v602
    %v604 = vlaneseq
    %v605 = vshrl.u32 %v604, 7
    %v606 = vsub.s32 2, %v605
    %v607 = vrot.slane %v192, %v606
    %v611 = vadd.f32 %v510, %v599
    %v612 = vadd.f32 %v512, %v603
    %v613 = vadd.f32 %v587, %v607
    %v614 = vadd.f32 %v516, %v599
    %v615 = vadd.f32 %v518, %v603
    %v616 = vadd.f32 %v592, %v607
    %617 = vmatprep.subr.mxu0 %v145
    %618 = vmatpush1.msra.mxu0 %v144
    %619 = vmatprep.subr.mxu0 %v147
    %620 = vmatpush1.msra.mxu0 %v146
    %621 = vmatprep.subr.mxu0 %v149
    %622 = vmatpush1.msra.mxu0 %v148
    %623 = vmatprep.subr.mxu0 %v151
    %624 = vmatpush1.msra.mxu0 %v150
    %625 = vmatprep.subr.mxu0 %v153
    %626 = vmatpush1.msra.mxu0 %v152
    %627 = vmatprep.subr.mxu0 %v155
    %628 = vmatpush1.msra.mxu0 %v154
    %629 = vmatprep.subr.mxu0 %v157
    %630 = vmatpush1.msra.mxu0 %v156
    %631 = vmatprep.subr.mxu0 %v159
    %632 = vmatpush1.msra.mxu0 %v158
    %633 = vmatprep.subr.mxu0 %v161
    %634 = vmatpush1.msra.mxu0 %v160
    %635 = vmatprep.subr.mxu0 %v163
    %636 = vmatpush1.msra.mxu0 %v162
    %637 = vmatprep.subr.mxu0 %v165
    %638 = vmatpush1.msra.mxu0 %v164
    %639 = vmatprep.subr.mxu0 %v167
    %640 = vmatpush1.msra.mxu0 %v166
    %641 = vmatprep.subr.mxu0 %v169
    %642 = vmatpush1.msra.mxu0 %v168
    %643 = vmatprep.subr.mxu0 %v171
    %644 = vmatpush1.msra.mxu0 %v170
    %645 = vmatprep.subr.mxu0 %v173
    %646 = vmatpush1.msra.mxu0 %v172
    %647 = vmatprep.subr.mxu0 %v175
    %648 = vmatpush1.msra.mxu0 %v174
    %649 = vmatprep.subr.mxu0 0.0
    %650 = vmatpush1.msra.mxu0 0.0
    %651 = vmatprep.subr.mxu0 0.0
    %652 = vmatpush1.msra.mxu0 0.0
    %653 = vmatprep.subr.mxu0 0.0
    %654 = vmatpush1.msra.mxu0 0.0
    %655 = vmatprep.subr.mxu0 0.0
    %656 = vmatpush1.msra.mxu0 0.0
    %657 = vmatprep.subr.mxu0 0.0
    %658 = vmatpush1.msra.mxu0 0.0
    %659 = vmatprep.subr.mxu0 0.0
    %660 = vmatpush1.msra.mxu0 0.0
    %661 = vmatprep.subr.mxu0 0.0
    %662 = vmatpush1.msra.mxu0 0.0
    %663 = vmatprep.subr.mxu0 0.0
    %664 = vmatpush1.msra.mxu0 0.0
    %665 = vmatprep.subr.mxu0 0.0
    %666 = vmatpush1.msra.mxu0 0.0
    %667 = vmatprep.subr.mxu0 0.0
    %668 = vmatpush1.msra.mxu0 0.0
    %669 = vmatprep.subr.mxu0 0.0
    %670 = vmatpush1.msra.mxu0 0.0
    %671 = vmatprep.subr.mxu0 0.0
    %672 = vmatpush1.msra.mxu0 0.0
    %673 = vmatprep.subr.mxu0 0.0
    %674 = vmatpush1.msra.mxu0 0.0
    %675 = vmatprep.subr.mxu0 0.0
    %676 = vmatpush1.msra.mxu0 0.0
    %677 = vmatprep.subr.mxu0 0.0
    %678 = vmatpush1.msra.mxu0 0.0
    %679 = vmatprep.subr.mxu0 0.0
    %680 = vmatpush1.msra.mxu0 0.0
    %681 = vmatprep.mubr.f32.mxu0 0.0
    %682 = vmatmul.mubr.f32.gmra.mrb[0].mxu0 %v42
    %v683 = vpop.f32.mrb[0].mxu0
    %v684 = vadd.f32 0.0, %v683
    %v685 = vpop.f32.mrb[0].mxu0
    %v686 = vadd.f32 0.0, %v685
    %687 = vmatprep.mubr.f32.mxu0 0.0
    %688 = vmatmul.mubr.f32.gmra.mrb[0].mxu0 %v43
    %v689 = vpop.f32.mrb[0].mxu0
    %v690 = vadd.f32 0.0, %v689
    %v691 = vpop.f32.mrb[0].mxu0
    %v692 = vadd.f32 0.0, %v691
    %693 = vdwg.mxu0
    %v694 = vadd.f32 %v611, %v684
    %v695 = vadd.f32 %v614, %v690
    %v696 = vxor.u32 %v694, 2147483648
    %v697 = vxor.u32 %v695, 2147483648
    %v698 = vmul.f32 %v696, 1.442695
    %v699 = vpow.pop %v698
    %v700 = vmul.f32 %v697, 1.442695
    %v701 = vpow.pop %v700
    %v702 = vadd.f32 %v699, 1.0
    %v703 = vadd.f32 %v701, 1.0
    %v704 = vrcp.pop %v702
    %v705 = vmul.f32 1.0, %v704
    %v706 = vrcp.pop %v703
    %v707 = vmul.f32 1.0, %v706
    %v708 = vadd.f32 %v612, %v686
    %v709 = vadd.f32 %v615, %v692
    %v710 = vxor.u32 %v708, 2147483648
    %v711 = vxor.u32 %v709, 2147483648
    %v712 = vmul.f32 %v710, 1.442695
    %v713 = vpow.pop %v712
    %v714 = vmul.f32 %v711, 1.442695
    %v715 = vpow.pop %v714
    %v716 = vadd.f32 %v713, 1.0
    %v717 = vadd.f32 %v715, 1.0
    %v718 = vrcp.pop %v716
    %v719 = vmul.f32 1.0, %v718
    %v720 = vrcp.pop %v717
    %v721 = vmul.f32 1.0, %v720
    %v722 = vmul.f32 %v705, %v42
    %v723 = vmul.f32 %v707, %v43
    %724 = vmatprep.subr.mxu0 0.0
    %725 = vmatpush1.msra.mxu0 %v176
    %726 = vmatprep.subr.mxu0 0.0
    %727 = vmatpush1.msra.mxu0 %v177
    %728 = vmatprep.subr.mxu0 0.0
    %729 = vmatpush1.msra.mxu0 %v178
    %730 = vmatprep.subr.mxu0 0.0
    %731 = vmatpush1.msra.mxu0 %v179
    %732 = vmatprep.subr.mxu0 0.0
    %733 = vmatpush1.msra.mxu0 %v180
    %734 = vmatprep.subr.mxu0 0.0
    %735 = vmatpush1.msra.mxu0 %v181
    %736 = vmatprep.subr.mxu0 0.0
    %737 = vmatpush1.msra.mxu0 %v182
    %738 = vmatprep.subr.mxu0 0.0
    %739 = vmatpush1.msra.mxu0 %v183
    %740 = vmatprep.subr.mxu0 0.0
    %741 = vmatpush1.msra.mxu0 %v184
    %742 = vmatprep.subr.mxu0 0.0
    %743 = vmatpush1.msra.mxu0 %v185
    %744 = vmatprep.subr.mxu0 0.0
    %745 = vmatpush1.msra.mxu0 %v186
    %746 = vmatprep.subr.mxu0 0.0
    %747 = vmatpush1.msra.mxu0 %v187
    %748 = vmatprep.subr.mxu0 0.0
    %749 = vmatpush1.msra.mxu0 %v188
    %750 = vmatprep.subr.mxu0 0.0
    %751 = vmatpush1.msra.mxu0 %v189
    %752 = vmatprep.subr.mxu0 0.0
    %753 = vmatpush1.msra.mxu0 %v190
    %754 = vmatprep.subr.mxu0 0.0
    %755 = vmatpush1.msra.mxu0 %v191
    %756 = vmatprep.subr.mxu0 0.0
    %757 = vmatpush1.msra.mxu0 0.0
    %758 = vmatprep.subr.mxu0 0.0
    %759 = vmatpush1.msra.mxu0 0.0
    %760 = vmatprep.subr.mxu0 0.0
    %761 = vmatpush1.msra.mxu0 0.0
    %762 = vmatprep.subr.mxu0 0.0
    %763 = vmatpush1.msra.mxu0 0.0
    %764 = vmatprep.subr.mxu0 0.0
    %765 = vmatpush1.msra.mxu0 0.0
    %766 = vmatprep.subr.mxu0 0.0
    %767 = vmatpush1.msra.mxu0 0.0
    %768 = vmatprep.subr.mxu0 0.0
    %769 = vmatpush1.msra.mxu0 0.0
    %770 = vmatprep.subr.mxu0 0.0
    %771 = vmatpush1.msra.mxu0 0.0
    %772 = vmatprep.subr.mxu0 0.0
    %773 = vmatpush1.msra.mxu0 0.0
    %774 = vmatprep.subr.mxu0 0.0
    %775 = vmatpush1.msra.mxu0 0.0
    %776 = vmatprep.subr.mxu0 0.0
    %777 = vmatpush1.msra.mxu0 0.0
    %778 = vmatprep.subr.mxu0 0.0
    %779 = vmatpush1.msra.mxu0 0.0
    %780 = vmatprep.subr.mxu0 0.0
    %781 = vmatpush1.msra.mxu0 0.0
    %782 = vmatprep.subr.mxu0 0.0
    %783 = vmatpush1.msra.mxu0 0.0
    %784 = vmatprep.subr.mxu0 0.0
    %785 = vmatpush1.msra.mxu0 0.0
    %786 = vmatprep.subr.mxu0 0.0
    %787 = vmatpush1.msra.mxu0 0.0
    %788 = vmatprep.mubr.f32.mxu0 0.0
    %789 = vmatmul.mubr.f32.gmra.mrb[0].mxu0 %v722
    %v790 = vpop.f32.mrb[0].mxu0
    %v791 = vadd.f32 0.0, %v790
    %v792 = vpop.f32.mrb[0].mxu0
    %793 = vmatprep.mubr.f32.mxu0 0.0
    %794 = vmatmul.mubr.f32.gmra.mrb[0].mxu0 %v723
    %v795 = vpop.f32.mrb[0].mxu0
    %v796 = vadd.f32 0.0, %v795
    %v797 = vpop.f32.mrb[0].mxu0
    %798 = vdwg.mxu0
    %v799 = vadd.f32 %v613, %v791
    %v800 = vadd.f32 %v616, %v796
    %v801 = vtanh.pop %v799
    %v802 = vtanh.pop %v800
    %v803 = vsub.f32 1.0, %v719
    %v804 = vsub.f32 1.0, %v721
    %v805 = vmul.f32 %v803, %v42
    %v806 = vmul.f32 %v804, %v43
    %v807 = vmul.f32 %v719, %v801
    %v808 = vmul.f32 %v721, %v802
    %v809 = vadd.f32 %v805, %v807
    %v810 = vadd.f32 %v806, %v808
    %811 = vmatprep.subr.mxu0 0.0
    %812 = vmatpush1.msra.mxu0 %v809
    %813 = vmatprep.subr.mxu0 0.0
    %814 = vmatpush1.msra.mxu0 %v810
    %815 = vmatprep.subr.mxu0 0.0
    %816 = vmatpush1.msra.mxu0 0.0
    %817 = vmatprep.subr.mxu0 0.0
    %818 = vmatpush1.msra.mxu0 0.0
    %819 = vmatprep.subr.mxu0 0.0
    %820 = vmatpush1.msra.mxu0 0.0
    %821 = vmatprep.subr.mxu0 0.0
    %822 = vmatpush1.msra.mxu0 0.0
    %823 = vmatprep.subr.mxu0 0.0
    %824 = vmatpush1.msra.mxu0 0.0
    %825 = vmatprep.subr.mxu0 0.0
    %826 = vmatpush1.msra.mxu0 0.0
    %827 = vmatprep.subr.mxu0 0.0
    %828 = vmatpush1.msra.mxu0 0.0
    %829 = vmatprep.subr.mxu0 0.0
    %830 = vmatpush1.msra.mxu0 0.0
    %831 = vmatprep.subr.mxu0 0.0
    %832 = vmatpush1.msra.mxu0 0.0
    %833 = vmatprep.subr.mxu0 0.0
    %834 = vmatpush1.msra.mxu0 0.0
    %835 = vmatprep.subr.mxu0 0.0
    %836 = vmatpush1.msra.mxu0 0.0
    %837 = vmatprep.subr.mxu0 0.0
    %838 = vmatpush1.msra.mxu0 0.0
    %839 = vmatprep.subr.mxu0 0.0
    %840 = vmatpush1.msra.mxu0 0.0
    %841 = vmatprep.subr.mxu0 0.0
    %842 = vmatpush1.msra.mxu0 0.0
    %843 = vmatprep.subr.mxu0 0.0
    %844 = vmatpush1.msra.mxu0 0.0
    %845 = vmatprep.subr.mxu0 0.0
    %846 = vmatpush1.msra.mxu0 0.0
    %847 = vmatprep.subr.mxu0 0.0
    %848 = vmatpush1.msra.mxu0 0.0
    %849 = vmatprep.subr.mxu0 0.0
    %850 = vmatpush1.msra.mxu0 0.0
    %851 = vmatprep.subr.mxu0 0.0
    %852 = vmatpush1.msra.mxu0 0.0
    %853 = vmatprep.subr.mxu0 0.0
    %854 = vmatpush1.msra.mxu0 0.0
    %855 = vmatprep.subr.mxu0 0.0
    %856 = vmatpush1.msra.mxu0 0.0
    %857 = vmatprep.subr.mxu0 0.0
    %858 = vmatpush1.msra.mxu0 0.0
    %859 = vmatprep.subr.mxu0 0.0
    %860 = vmatpush1.msra.mxu0 0.0
    %861 = vmatprep.subr.mxu0 0.0
    %862 = vmatpush1.msra.mxu0 0.0
    %863 = vmatprep.subr.mxu0 0.0
    %864 = vmatpush1.msra.mxu0 0.0
    %865 = vmatprep.subr.mxu0 0.0
    %866 = vmatpush1.msra.mxu0 0.0
    %867 = vmatprep.subr.mxu0 0.0
    %868 = vmatpush1.msra.mxu0 0.0
    %869 = vmatprep.subr.mxu0 0.0
    %870 = vmatpush1.msra.mxu0 0.0
    %871 = vmatprep.subr.mxu0 0.0
    %872 = vmatpush1.msra.mxu0 0.0
    %873 = vmatprep.subr.mxu0 0.0
    %874 = vmatpush1.msra.mxu0 0.0
    %875 = vmatprep.mubr.f32.mxu0 0.0
    %876 = vmatmul.mubr.f32.gmra.mrb[0].mxu0 %v195
    %v877 = vpop.f32.mrb[0].mxu0
    %v878 = vadd.f32 0.0, %v877
    %v879 = vpop.f32.mrb[0].mxu0
    %880 = vmatprep.mubr.f32.mxu0 0.0
    %881 = vmatmul.mubr.f32.gmra.mrb[0].mxu0 %v198
    %v882 = vpop.f32.mrb[0].mxu0
    %v883 = vadd.f32 0.0, %v882
    %v884 = vpop.f32.mrb[0].mxu0
    %885 = vmatprep.mubr.f32.mxu0 0.0
    %886 = vmatmul.mubr.f32.gmra.mrb[0].mxu0 %v201
    %v887 = vpop.f32.mrb[0].mxu0
    %v888 = vadd.f32 0.0, %v887
    %v889 = vpop.f32.mrb[0].mxu0
    %890 = vmatprep.mubr.f32.mxu0 0.0
    %891 = vmatmul.mubr.f32.gmra.mrb[0].mxu0 %v204
    %v892 = vpop.f32.mrb[0].mxu0
    %v893 = vadd.f32 0.0, %v892
    %v894 = vpop.f32.mrb[0].mxu0
    %895 = vdwg.mxu0
    %896 = vmatprep.subr.mxu0 %v97
    %897 = vmatpush1.msra.mxu0 %v96
    %898 = vmatprep.subr.mxu0 %v100
    %899 = vmatpush1.msra.mxu0 %v99
    %900 = vmatprep.subr.mxu0 %v103
    %901 = vmatpush1.msra.mxu0 %v102
    %902 = vmatprep.subr.mxu0 %v106
    %903 = vmatpush1.msra.mxu0 %v105
    %904 = vmatprep.subr.mxu0 %v109
    %905 = vmatpush1.msra.mxu0 %v108
    %906 = vmatprep.subr.mxu0 %v112
    %907 = vmatpush1.msra.mxu0 %v111
    %908 = vmatprep.subr.mxu0 %v115
    %909 = vmatpush1.msra.mxu0 %v114
    %910 = vmatprep.subr.mxu0 %v118
    %911 = vmatpush1.msra.mxu0 %v117
    %912 = vmatprep.subr.mxu0 %v121
    %913 = vmatpush1.msra.mxu0 %v120
    %914 = vmatprep.subr.mxu0 %v124
    %915 = vmatpush1.msra.mxu0 %v123
    %916 = vmatprep.subr.mxu0 %v127
    %917 = vmatpush1.msra.mxu0 %v126
    %918 = vmatprep.subr.mxu0 %v130
    %919 = vmatpush1.msra.mxu0 %v129
    %920 = vmatprep.subr.mxu0 %v133
    %921 = vmatpush1.msra.mxu0 %v132
    %922 = vmatprep.subr.mxu0 %v136
    %923 = vmatpush1.msra.mxu0 %v135
    %924 = vmatprep.subr.mxu0 %v139
    %925 = vmatpush1.msra.mxu0 %v138
    %926 = vmatprep.subr.mxu0 %v142
    %927 = vmatpush1.msra.mxu0 %v141
    %928 = vmatprep.subr.mxu0 0.0
    %929 = vmatpush1.msra.mxu0 0.0
    %930 = vmatprep.subr.mxu0 0.0
    %931 = vmatpush1.msra.mxu0 0.0
    %932 = vmatprep.subr.mxu0 0.0
    %933 = vmatpush1.msra.mxu0 0.0
    %934 = vmatprep.subr.mxu0 0.0
    %935 = vmatpush1.msra.mxu0 0.0
    %936 = vmatprep.subr.mxu0 0.0
    %937 = vmatpush1.msra.mxu0 0.0
    %938 = vmatprep.subr.mxu0 0.0
    %939 = vmatpush1.msra.mxu0 0.0
    %940 = vmatprep.subr.mxu0 0.0
    %941 = vmatpush1.msra.mxu0 0.0
    %942 = vmatprep.subr.mxu0 0.0
    %943 = vmatpush1.msra.mxu0 0.0
    %944 = vmatprep.subr.mxu0 0.0
    %945 = vmatpush1.msra.mxu0 0.0
    %946 = vmatprep.subr.mxu0 0.0
    %947 = vmatpush1.msra.mxu0 0.0
    %948 = vmatprep.subr.mxu0 0.0
    %949 = vmatpush1.msra.mxu0 0.0
    %950 = vmatprep.subr.mxu0 0.0
    %951 = vmatpush1.msra.mxu0 0.0
    %952 = vmatprep.subr.mxu0 0.0
    %953 = vmatpush1.msra.mxu0 0.0
    %954 = vmatprep.subr.mxu0 0.0
    %955 = vmatpush1.msra.mxu0 0.0
    %956 = vmatprep.subr.mxu0 0.0
    %957 = vmatpush1.msra.mxu0 0.0
    %958 = vmatprep.subr.mxu0 0.0
    %959 = vmatpush1.msra.mxu0 0.0
    %960 = vmatprep.mubr.f32.mxu0 0.0
    %961 = vmatmul.mubr.f32.gmra.mrb[0].mxu0 %v888
    %v962 = vpop.f32.mrb[0].mxu0
    %v963 = vadd.f32 0.0, %v962
    %v964 = vpop.f32.mrb[0].mxu0
    %v965 = vadd.f32 0.0, %v964
    %966 = vmatprep.mubr.f32.mxu0 0.0
    %967 = vmatmul.mubr.f32.gmra.mrb[0].mxu0 %v893
    %v968 = vpop.f32.mrb[0].mxu0
    %v969 = vadd.f32 0.0, %v968
    %v970 = vpop.f32.mrb[0].mxu0
    %v971 = vadd.f32 0.0, %v970
    %972 = vdwg.mxu0
    %973 = vmatprep.subr.mxu0 0.0
    %974 = vmatpush1.msra.mxu0 %v98
    %975 = vmatprep.subr.mxu0 0.0
    %976 = vmatpush1.msra.mxu0 %v101
    %977 = vmatprep.subr.mxu0 0.0
    %978 = vmatpush1.msra.mxu0 %v104
    %979 = vmatprep.subr.mxu0 0.0
    %980 = vmatpush1.msra.mxu0 %v107
    %981 = vmatprep.subr.mxu0 0.0
    %982 = vmatpush1.msra.mxu0 %v110
    %983 = vmatprep.subr.mxu0 0.0
    %984 = vmatpush1.msra.mxu0 %v113
    %985 = vmatprep.subr.mxu0 0.0
    %986 = vmatpush1.msra.mxu0 %v116
    %987 = vmatprep.subr.mxu0 0.0
    %988 = vmatpush1.msra.mxu0 %v119
    %989 = vmatprep.subr.mxu0 0.0
    %990 = vmatpush1.msra.mxu0 %v122
    %991 = vmatprep.subr.mxu0 0.0
    %992 = vmatpush1.msra.mxu0 %v125
    %993 = vmatprep.subr.mxu0 0.0
    %994 = vmatpush1.msra.mxu0 %v128
    %995 = vmatprep.subr.mxu0 0.0
    %996 = vmatpush1.msra.mxu0 %v131
    %997 = vmatprep.subr.mxu0 0.0
    %998 = vmatpush1.msra.mxu0 %v134
    %999 = vmatprep.subr.mxu0 0.0
    %1000 = vmatpush1.msra.mxu0 %v137
    %1001 = vmatprep.subr.mxu0 0.0
    %1002 = vmatpush1.msra.mxu0 %v140
    %1003 = vmatprep.subr.mxu0 0.0
    %1004 = vmatpush1.msra.mxu0 %v143
    %1005 = vmatprep.subr.mxu0 0.0
    %1006 = vmatpush1.msra.mxu0 0.0
    %1007 = vmatprep.subr.mxu0 0.0
    %1008 = vmatpush1.msra.mxu0 0.0
    %1009 = vmatprep.subr.mxu0 0.0
    %1010 = vmatpush1.msra.mxu0 0.0
    %1011 = vmatprep.subr.mxu0 0.0
    %1012 = vmatpush1.msra.mxu0 0.0
    %1013 = vmatprep.subr.mxu0 0.0
    %1014 = vmatpush1.msra.mxu0 0.0
    %1015 = vmatprep.subr.mxu0 0.0
    %1016 = vmatpush1.msra.mxu0 0.0
    %1017 = vmatprep.subr.mxu0 0.0
    %1018 = vmatpush1.msra.mxu0 0.0
    %1019 = vmatprep.subr.mxu0 0.0
    %1020 = vmatpush1.msra.mxu0 0.0
    %1021 = vmatprep.subr.mxu0 0.0
    %1022 = vmatpush1.msra.mxu0 0.0
    %1023 = vmatprep.subr.mxu0 0.0
    %1024 = vmatpush1.msra.mxu0 0.0
    %1025 = vmatprep.subr.mxu0 0.0
    %1026 = vmatpush1.msra.mxu0 0.0
    %1027 = vmatprep.subr.mxu0 0.0
    %1028 = vmatpush1.msra.mxu0 0.0
    %1029 = vmatprep.subr.mxu0 0.0
    %1030 = vmatpush1.msra.mxu0 0.0
    %1031 = vmatprep.subr.mxu0 0.0
    %1032 = vmatpush1.msra.mxu0 0.0
    %1033 = vmatprep.subr.mxu0 0.0
    %1034 = vmatpush1.msra.mxu0 0.0
    %1035 = vmatprep.subr.mxu0 0.0
    %1036 = vmatpush1.msra.mxu0 0.0
    %1037 = vmatprep.mubr.f32.mxu0 0.0
    %1038 = vmatmul.mubr.f32.gmra.mrb[0].mxu0 %v888
    %v1039 = vpop.f32.mrb[0].mxu0
    %v1040 = vadd.f32 0.0, %v1039
    %v1041 = vpop.f32.mrb[0].mxu0
    %1042 = vmatprep.mubr.f32.mxu0 0.0
    %1043 = vmatmul.mubr.f32.gmra.mrb[0].mxu0 %v893
    %v1044 = vpop.f32.mrb[0].mxu0
    %v1045 = vadd.f32 0.0, %v1044
    %v1046 = vpop.f32.mrb[0].mxu0
    %1047 = vdwg.mxu0
    %1048 = vmatprep.subr.mxu0 %v49
    %1049 = vmatpush1.msra.mxu0 %v48
    %1050 = vmatprep.subr.mxu0 %v52
    %1051 = vmatpush1.msra.mxu0 %v51
    %1052 = vmatprep.subr.mxu0 %v55
    %1053 = vmatpush1.msra.mxu0 %v54
    %1054 = vmatprep.subr.mxu0 %v58
    %1055 = vmatpush1.msra.mxu0 %v57
    %1056 = vmatprep.subr.mxu0 %v61
    %1057 = vmatpush1.msra.mxu0 %v60
    %1058 = vmatprep.subr.mxu0 %v64
    %1059 = vmatpush1.msra.mxu0 %v63
    %1060 = vmatprep.subr.mxu0 %v67
    %1061 = vmatpush1.msra.mxu0 %v66
    %1062 = vmatprep.subr.mxu0 %v70
    %1063 = vmatpush1.msra.mxu0 %v69
    %1064 = vmatprep.subr.mxu0 %v73
    %1065 = vmatpush1.msra.mxu0 %v72
    %1066 = vmatprep.subr.mxu0 %v76
    %1067 = vmatpush1.msra.mxu0 %v75
    %1068 = vmatprep.subr.mxu0 %v79
    %1069 = vmatpush1.msra.mxu0 %v78
    %1070 = vmatprep.subr.mxu0 %v82
    %1071 = vmatpush1.msra.mxu0 %v81
    %1072 = vmatprep.subr.mxu0 %v85
    %1073 = vmatpush1.msra.mxu0 %v84
    %1074 = vmatprep.subr.mxu0 %v88
    %1075 = vmatpush1.msra.mxu0 %v87
    %1076 = vmatprep.subr.mxu0 %v91
    %1077 = vmatpush1.msra.mxu0 %v90
    %1078 = vmatprep.subr.mxu0 %v94
    %1079 = vmatpush1.msra.mxu0 %v93
    %1080 = vmatprep.subr.mxu0 0.0
    %1081 = vmatpush1.msra.mxu0 0.0
    %1082 = vmatprep.subr.mxu0 0.0
    %1083 = vmatpush1.msra.mxu0 0.0
    %1084 = vmatprep.subr.mxu0 0.0
    %1085 = vmatpush1.msra.mxu0 0.0
    %1086 = vmatprep.subr.mxu0 0.0
    %1087 = vmatpush1.msra.mxu0 0.0
    %1088 = vmatprep.subr.mxu0 0.0
    %1089 = vmatpush1.msra.mxu0 0.0
    %1090 = vmatprep.subr.mxu0 0.0
    %1091 = vmatpush1.msra.mxu0 0.0
    %1092 = vmatprep.subr.mxu0 0.0
    %1093 = vmatpush1.msra.mxu0 0.0
    %1094 = vmatprep.subr.mxu0 0.0
    %1095 = vmatpush1.msra.mxu0 0.0
    %1096 = vmatprep.subr.mxu0 0.0
    %1097 = vmatpush1.msra.mxu0 0.0
    %1098 = vmatprep.subr.mxu0 0.0
    %1099 = vmatpush1.msra.mxu0 0.0
    %1100 = vmatprep.subr.mxu0 0.0
    %1101 = vmatpush1.msra.mxu0 0.0
    %1102 = vmatprep.subr.mxu0 0.0
    %1103 = vmatpush1.msra.mxu0 0.0
    %1104 = vmatprep.subr.mxu0 0.0
    %1105 = vmatpush1.msra.mxu0 0.0
    %1106 = vmatprep.subr.mxu0 0.0
    %1107 = vmatpush1.msra.mxu0 0.0
    %1108 = vmatprep.subr.mxu0 0.0
    %1109 = vmatpush1.msra.mxu0 0.0
    %1110 = vmatprep.subr.mxu0 0.0
    %1111 = vmatpush1.msra.mxu0 0.0
    %1112 = vmatprep.mubr.f32.mxu0 0.0
    %1113 = vmatmul.mubr.f32.gmra.mrb[0].mxu0 %v878
    %v1114 = vpop.f32.mrb[0].mxu0
    %v1115 = vadd.f32 %v963, %v1114
    %v1116 = vpop.f32.mrb[0].mxu0
    %v1117 = vadd.f32 %v965, %v1116
    %1118 = vmatprep.mubr.f32.mxu0 0.0
    %1119 = vmatmul.mubr.f32.gmra.mrb[0].mxu0 %v883
    %v1120 = vpop.f32.mrb[0].mxu0
    %v1121 = vadd.f32 %v969, %v1120
    %v1122 = vpop.f32.mrb[0].mxu0
    %v1123 = vadd.f32 %v971, %v1122
    %1124 = vdwg.mxu0
    %1125 = vmatprep.subr.mxu0 0.0
    %1126 = vmatpush1.msra.mxu0 %v50
    %1127 = vmatprep.subr.mxu0 0.0
    %1128 = vmatpush1.msra.mxu0 %v53
    %1129 = vmatprep.subr.mxu0 0.0
    %1130 = vmatpush1.msra.mxu0 %v56
    %1131 = vmatprep.subr.mxu0 0.0
    %1132 = vmatpush1.msra.mxu0 %v59
    %1133 = vmatprep.subr.mxu0 0.0
    %1134 = vmatpush1.msra.mxu0 %v62
    %1135 = vmatprep.subr.mxu0 0.0
    %1136 = vmatpush1.msra.mxu0 %v65
    %1137 = vmatprep.subr.mxu0 0.0
    %1138 = vmatpush1.msra.mxu0 %v68
    %1139 = vmatprep.subr.mxu0 0.0
    %1140 = vmatpush1.msra.mxu0 %v71
    %1141 = vmatprep.subr.mxu0 0.0
    %1142 = vmatpush1.msra.mxu0 %v74
    %1143 = vmatprep.subr.mxu0 0.0
    %1144 = vmatpush1.msra.mxu0 %v77
    %1145 = vmatprep.subr.mxu0 0.0
    %1146 = vmatpush1.msra.mxu0 %v80
    %1147 = vmatprep.subr.mxu0 0.0
    %1148 = vmatpush1.msra.mxu0 %v83
    %1149 = vmatprep.subr.mxu0 0.0
    %1150 = vmatpush1.msra.mxu0 %v86
    %1151 = vmatprep.subr.mxu0 0.0
    %1152 = vmatpush1.msra.mxu0 %v89
    %1153 = vmatprep.subr.mxu0 0.0
    %1154 = vmatpush1.msra.mxu0 %v92
    %1155 = vmatprep.subr.mxu0 0.0
    %1156 = vmatpush1.msra.mxu0 %v95
    %1157 = vmatprep.subr.mxu0 0.0
    %1158 = vmatpush1.msra.mxu0 0.0
    %1159 = vmatprep.subr.mxu0 0.0
    %1160 = vmatpush1.msra.mxu0 0.0
    %1161 = vmatprep.subr.mxu0 0.0
    %1162 = vmatpush1.msra.mxu0 0.0
    %1163 = vmatprep.subr.mxu0 0.0
    %1164 = vmatpush1.msra.mxu0 0.0
    %1165 = vmatprep.subr.mxu0 0.0
    %1166 = vmatpush1.msra.mxu0 0.0
    %1167 = vmatprep.subr.mxu0 0.0
    %1168 = vmatpush1.msra.mxu0 0.0
    %1169 = vmatprep.subr.mxu0 0.0
    %1170 = vmatpush1.msra.mxu0 0.0
    %1171 = vmatprep.subr.mxu0 0.0
    %1172 = vmatpush1.msra.mxu0 0.0
    %1173 = vmatprep.subr.mxu0 0.0
    %1174 = vmatpush1.msra.mxu0 0.0
    %1175 = vmatprep.subr.mxu0 0.0
    %1176 = vmatpush1.msra.mxu0 0.0
    %1177 = vmatprep.subr.mxu0 0.0
    %1178 = vmatpush1.msra.mxu0 0.0
    %1179 = vmatprep.subr.mxu0 0.0
    %1180 = vmatpush1.msra.mxu0 0.0
    %1181 = vmatprep.subr.mxu0 0.0
    %1182 = vmatpush1.msra.mxu0 0.0
    %1183 = vmatprep.subr.mxu0 0.0
    %1184 = vmatpush1.msra.mxu0 0.0
    %1185 = vmatprep.subr.mxu0 0.0
    %1186 = vmatpush1.msra.mxu0 0.0
    %1187 = vmatprep.subr.mxu0 0.0
    %1188 = vmatpush1.msra.mxu0 0.0
    %1189 = vmatprep.mubr.f32.mxu0 0.0
    %1190 = vmatmul.mubr.f32.gmra.mrb[0].mxu0 %v878
    %v1191 = vpop.f32.mrb[0].mxu0
    %v1192 = vadd.f32 %v1040, %v1191
    %v1193 = vpop.f32.mrb[0].mxu0
    %1194 = vmatprep.mubr.f32.mxu0 0.0
    %1195 = vmatmul.mubr.f32.gmra.mrb[0].mxu0 %v883
    %v1196 = vpop.f32.mrb[0].mxu0
    %v1197 = vadd.f32 %v1045, %v1196
    %v1198 = vpop.f32.mrb[0].mxu0
    %1199 = vdwg.mxu0
    %v1200 = vadd.f32 %v1115, %v599
    %v1201 = vadd.f32 %v1117, %v603
    %v1202 = vadd.f32 %v1192, %v607
    %v1203 = vadd.f32 %v1121, %v599
    %v1204 = vadd.f32 %v1123, %v603
    %v1205 = vadd.f32 %v1197, %v607
    %1206 = vmatprep.subr.mxu0 %v145
    %1207 = vmatpush1.msra.mxu0 %v144
    %1208 = vmatprep.subr.mxu0 %v147
    %1209 = vmatpush1.msra.mxu0 %v146
    %1210 = vmatprep.subr.mxu0 %v149
    %1211 = vmatpush1.msra.mxu0 %v148
    %1212 = vmatprep.subr.mxu0 %v151
    %1213 = vmatpush1.msra.mxu0 %v150
    %1214 = vmatprep.subr.mxu0 %v153
    %1215 = vmatpush1.msra.mxu0 %v152
    %1216 = vmatprep.subr.mxu0 %v155
    %1217 = vmatpush1.msra.mxu0 %v154
    %1218 = vmatprep.subr.mxu0 %v157
    %1219 = vmatpush1.msra.mxu0 %v156
    %1220 = vmatprep.subr.mxu0 %v159
    %1221 = vmatpush1.msra.mxu0 %v158
    %1222 = vmatprep.subr.mxu0 %v161
    %1223 = vmatpush1.msra.mxu0 %v160
    %1224 = vmatprep.subr.mxu0 %v163
    %1225 = vmatpush1.msra.mxu0 %v162
    %1226 = vmatprep.subr.mxu0 %v165
    %1227 = vmatpush1.msra.mxu0 %v164
    %1228 = vmatprep.subr.mxu0 %v167
    %1229 = vmatpush1.msra.mxu0 %v166
    %1230 = vmatprep.subr.mxu0 %v169
    %1231 = vmatpush1.msra.mxu0 %v168
    %1232 = vmatprep.subr.mxu0 %v171
    %1233 = vmatpush1.msra.mxu0 %v170
    %1234 = vmatprep.subr.mxu0 %v173
    %1235 = vmatpush1.msra.mxu0 %v172
    %1236 = vmatprep.subr.mxu0 %v175
    %1237 = vmatpush1.msra.mxu0 %v174
    %1238 = vmatprep.subr.mxu0 0.0
    %1239 = vmatpush1.msra.mxu0 0.0
    %1240 = vmatprep.subr.mxu0 0.0
    %1241 = vmatpush1.msra.mxu0 0.0
    %1242 = vmatprep.subr.mxu0 0.0
    %1243 = vmatpush1.msra.mxu0 0.0
    %1244 = vmatprep.subr.mxu0 0.0
    %1245 = vmatpush1.msra.mxu0 0.0
    %1246 = vmatprep.subr.mxu0 0.0
    %1247 = vmatpush1.msra.mxu0 0.0
    %1248 = vmatprep.subr.mxu0 0.0
    %1249 = vmatpush1.msra.mxu0 0.0
    %1250 = vmatprep.subr.mxu0 0.0
    %1251 = vmatpush1.msra.mxu0 0.0
    %1252 = vmatprep.subr.mxu0 0.0
    %1253 = vmatpush1.msra.mxu0 0.0
    %1254 = vmatprep.subr.mxu0 0.0
    %1255 = vmatpush1.msra.mxu0 0.0
    %1256 = vmatprep.subr.mxu0 0.0
    %1257 = vmatpush1.msra.mxu0 0.0
    %1258 = vmatprep.subr.mxu0 0.0
    %1259 = vmatpush1.msra.mxu0 0.0
    %1260 = vmatprep.subr.mxu0 0.0
    %1261 = vmatpush1.msra.mxu0 0.0
    %1262 = vmatprep.subr.mxu0 0.0
    %1263 = vmatpush1.msra.mxu0 0.0
    %1264 = vmatprep.subr.mxu0 0.0
    %1265 = vmatpush1.msra.mxu0 0.0
    %1266 = vmatprep.subr.mxu0 0.0
    %1267 = vmatpush1.msra.mxu0 0.0
    %1268 = vmatprep.subr.mxu0 0.0
    %1269 = vmatpush1.msra.mxu0 0.0
    %1270 = vmatprep.mubr.f32.mxu0 0.0
    %1271 = vmatmul.mubr.f32.gmra.mrb[0].mxu0 %v809
    %v1272 = vpop.f32.mrb[0].mxu0
    %v1273 = vadd.f32 0.0, %v1272
    %v1274 = vpop.f32.mrb[0].mxu0
    %v1275 = vadd.f32 0.0, %v1274
    %1276 = vmatprep.mubr.f32.mxu0 0.0
    %1277 = vmatmul.mubr.f32.gmra.mrb[0].mxu0 %v810
    %v1278 = vpop.f32.mrb[0].mxu0
    %v1279 = vadd.f32 0.0, %v1278
    %v1280 = vpop.f32.mrb[0].mxu0
    %v1281 = vadd.f32 0.0, %v1280
    %1282 = vdwg.mxu0
    %v1283 = vadd.f32 %v1200, %v1273
    %v1284 = vadd.f32 %v1203, %v1279
    %v1285 = vxor.u32 %v1283, 2147483648
    %v1286 = vxor.u32 %v1284, 2147483648
    %v1287 = vmul.f32 %v1285, 1.442695
    %v1288 = vpow.pop %v1287
    %v1289 = vmul.f32 %v1286, 1.442695
    %v1290 = vpow.pop %v1289
    %v1291 = vadd.f32 %v1288, 1.0
    %v1292 = vadd.f32 %v1290, 1.0
    %v1293 = vrcp.pop %v1291
    %v1294 = vmul.f32 1.0, %v1293
    %v1295 = vrcp.pop %v1292
    %v1296 = vmul.f32 1.0, %v1295
    %v1297 = vadd.f32 %v1201, %v1275
    %v1298 = vadd.f32 %v1204, %v1281
    %v1299 = vxor.u32 %v1297, 2147483648
    %v1300 = vxor.u32 %v1298, 2147483648
    %v1301 = vmul.f32 %v1299, 1.442695
    %v1302 = vpow.pop %v1301
    %v1303 = vmul.f32 %v1300, 1.442695
    %v1304 = vpow.pop %v1303
    %v1305 = vadd.f32 %v1302, 1.0
    %v1306 = vadd.f32 %v1304, 1.0
    %v1307 = vrcp.pop %v1305
    %v1308 = vmul.f32 1.0, %v1307
    %v1309 = vrcp.pop %v1306
    %v1310 = vmul.f32 1.0, %v1309
    %v1311 = vmul.f32 %v1294, %v809
    %v1312 = vmul.f32 %v1296, %v810
    %1313 = vmatprep.subr.mxu0 0.0
    %1314 = vmatpush1.msra.mxu0 %v176
    %1315 = vmatprep.subr.mxu0 0.0
    %1316 = vmatpush1.msra.mxu0 %v177
    %1317 = vmatprep.subr.mxu0 0.0
    %1318 = vmatpush1.msra.mxu0 %v178
    %1319 = vmatprep.subr.mxu0 0.0
    %1320 = vmatpush1.msra.mxu0 %v179
    %1321 = vmatprep.subr.mxu0 0.0
    %1322 = vmatpush1.msra.mxu0 %v180
    %1323 = vmatprep.subr.mxu0 0.0
    %1324 = vmatpush1.msra.mxu0 %v181
    %1325 = vmatprep.subr.mxu0 0.0
    %1326 = vmatpush1.msra.mxu0 %v182
    %1327 = vmatprep.subr.mxu0 0.0
    %1328 = vmatpush1.msra.mxu0 %v183
    %1329 = vmatprep.subr.mxu0 0.0
    %1330 = vmatpush1.msra.mxu0 %v184
    %1331 = vmatprep.subr.mxu0 0.0
    %1332 = vmatpush1.msra.mxu0 %v185
    %1333 = vmatprep.subr.mxu0 0.0
    %1334 = vmatpush1.msra.mxu0 %v186
    %1335 = vmatprep.subr.mxu0 0.0
    %1336 = vmatpush1.msra.mxu0 %v187
    %1337 = vmatprep.subr.mxu0 0.0
    %1338 = vmatpush1.msra.mxu0 %v188
    %1339 = vmatprep.subr.mxu0 0.0
    %1340 = vmatpush1.msra.mxu0 %v189
    %1341 = vmatprep.subr.mxu0 0.0
    %1342 = vmatpush1.msra.mxu0 %v190
    %1343 = vmatprep.subr.mxu0 0.0
    %1344 = vmatpush1.msra.mxu0 %v191
    %1345 = vmatprep.subr.mxu0 0.0
    %1346 = vmatpush1.msra.mxu0 0.0
    %1347 = vmatprep.subr.mxu0 0.0
    %1348 = vmatpush1.msra.mxu0 0.0
    %1349 = vmatprep.subr.mxu0 0.0
    %1350 = vmatpush1.msra.mxu0 0.0
    %1351 = vmatprep.subr.mxu0 0.0
    %1352 = vmatpush1.msra.mxu0 0.0
    %1353 = vmatprep.subr.mxu0 0.0
    %1354 = vmatpush1.msra.mxu0 0.0
    %1355 = vmatprep.subr.mxu0 0.0
    %1356 = vmatpush1.msra.mxu0 0.0
    %1357 = vmatprep.subr.mxu0 0.0
    %1358 = vmatpush1.msra.mxu0 0.0
    %1359 = vmatprep.subr.mxu0 0.0
    %1360 = vmatpush1.msra.mxu0 0.0
    %1361 = vmatprep.subr.mxu0 0.0
    %1362 = vmatpush1.msra.mxu0 0.0
    %1363 = vmatprep.subr.mxu0 0.0
    %1364 = vmatpush1.msra.mxu0 0.0
    %1365 = vmatprep.subr.mxu0 0.0
    %1366 = vmatpush1.msra.mxu0 0.0
    %1367 = vmatprep.subr.mxu0 0.0
    %1368 = vmatpush1.msra.mxu0 0.0
    %1369 = vmatprep.subr.mxu0 0.0
    %1370 = vmatpush1.msra.mxu0 0.0
    %1371 = vmatprep.subr.mxu0 0.0
    %1372 = vmatpush1.msra.mxu0 0.0
    %1373 = vmatprep.subr.mxu0 0.0
    %1374 = vmatpush1.msra.mxu0 0.0
    %1375 = vmatprep.subr.mxu0 0.0
    %1376 = vmatpush1.msra.mxu0 0.0
    %1377 = vmatprep.mubr.f32.mxu0 0.0
    %1378 = vmatmul.mubr.f32.gmra.mrb[0].mxu0 %v1311
    %v1379 = vpop.f32.mrb[0].mxu0
    %v1380 = vadd.f32 0.0, %v1379
    %v1381 = vpop.f32.mrb[0].mxu0
    %1382 = vmatprep.mubr.f32.mxu0 0.0
    %1383 = vmatmul.mubr.f32.gmra.mrb[0].mxu0 %v1312
    %v1384 = vpop.f32.mrb[0].mxu0
    %v1385 = vadd.f32 0.0, %v1384
    %v1386 = vpop.f32.mrb[0].mxu0
    %1387 = vdwg.mxu0
    %v1388 = vadd.f32 %v1202, %v1380
    %v1389 = vadd.f32 %v1205, %v1385
    %v1390 = vtanh.pop %v1388
    %v1391 = vtanh.pop %v1389
    %v1392 = vsub.f32 1.0, %v1308
    %v1393 = vsub.f32 1.0, %v1310
    %v1394 = vmul.f32 %v1392, %v809
    %v1395 = vmul.f32 %v1393, %v810
    %v1396 = vmul.f32 %v1308, %v1390
    %v1397 = vmul.f32 %v1310, %v1391
    %v1398 = vadd.f32 %v1394, %v1396
    %v1399 = vadd.f32 %v1395, %v1397
    %1400 = vmatprep.subr.mxu0 0.0
    %1401 = vmatpush1.msra.mxu0 %v1398
    %1402 = vmatprep.subr.mxu0 0.0
    %1403 = vmatpush1.msra.mxu0 %v1399
    %1404 = vmatprep.subr.mxu0 0.0
    %1405 = vmatpush1.msra.mxu0 0.0
    %1406 = vmatprep.subr.mxu0 0.0
    %1407 = vmatpush1.msra.mxu0 0.0
    %1408 = vmatprep.subr.mxu0 0.0
    %1409 = vmatpush1.msra.mxu0 0.0
    %1410 = vmatprep.subr.mxu0 0.0
    %1411 = vmatpush1.msra.mxu0 0.0
    %1412 = vmatprep.subr.mxu0 0.0
    %1413 = vmatpush1.msra.mxu0 0.0
    %1414 = vmatprep.subr.mxu0 0.0
    %1415 = vmatpush1.msra.mxu0 0.0
    %1416 = vmatprep.subr.mxu0 0.0
    %1417 = vmatpush1.msra.mxu0 0.0
    %1418 = vmatprep.subr.mxu0 0.0
    %1419 = vmatpush1.msra.mxu0 0.0
    %1420 = vmatprep.subr.mxu0 0.0
    %1421 = vmatpush1.msra.mxu0 0.0
    %1422 = vmatprep.subr.mxu0 0.0
    %1423 = vmatpush1.msra.mxu0 0.0
    %1424 = vmatprep.subr.mxu0 0.0
    %1425 = vmatpush1.msra.mxu0 0.0
    %1426 = vmatprep.subr.mxu0 0.0
    %1427 = vmatpush1.msra.mxu0 0.0
    %1428 = vmatprep.subr.mxu0 0.0
    %1429 = vmatpush1.msra.mxu0 0.0
    %1430 = vmatprep.subr.mxu0 0.0
    %1431 = vmatpush1.msra.mxu0 0.0
    %1432 = vmatprep.subr.mxu0 0.0
    %1433 = vmatpush1.msra.mxu0 0.0
    %1434 = vmatprep.subr.mxu0 0.0
    %1435 = vmatpush1.msra.mxu0 0.0
    %1436 = vmatprep.subr.mxu0 0.0
    %1437 = vmatpush1.msra.mxu0 0.0
    %1438 = vmatprep.subr.mxu0 0.0
    %1439 = vmatpush1.msra.mxu0 0.0
    %1440 = vmatprep.subr.mxu0 0.0
    %1441 = vmatpush1.msra.mxu0 0.0
    %1442 = vmatprep.subr.mxu0 0.0
    %1443 = vmatpush1.msra.mxu0 0.0
    %1444 = vmatprep.subr.mxu0 0.0
    %1445 = vmatpush1.msra.mxu0 0.0
    %1446 = vmatprep.subr.mxu0 0.0
    %1447 = vmatpush1.msra.mxu0 0.0
    %1448 = vmatprep.subr.mxu0 0.0
    %1449 = vmatpush1.msra.mxu0 0.0
    %1450 = vmatprep.subr.mxu0 0.0
    %1451 = vmatpush1.msra.mxu0 0.0
    %1452 = vmatprep.subr.mxu0 0.0
    %1453 = vmatpush1.msra.mxu0 0.0
    %1454 = vmatprep.subr.mxu0 0.0
    %1455 = vmatpush1.msra.mxu0 0.0
    %1456 = vmatprep.subr.mxu0 0.0
    %1457 = vmatpush1.msra.mxu0 0.0
    %1458 = vmatprep.subr.mxu0 0.0
    %1459 = vmatpush1.msra.mxu0 0.0
    %1460 = vmatprep.subr.mxu0 0.0
    %1461 = vmatpush1.msra.mxu0 0.0
    %1462 = vmatprep.subr.mxu0 0.0
    %1463 = vmatpush1.msra.mxu0 0.0
    %1464 = vmatprep.mubr.f32.mxu0 0.0
    %1465 = vmatmul.mubr.f32.gmra.mrb[0].mxu0 %v195
    %v1466 = vpop.f32.mrb[0].mxu0
    %v1467 = vadd.f32 0.0, %v1466
    %v1468 = vpop.f32.mrb[0].mxu0
    %1469 = vmatprep.mubr.f32.mxu0 0.0
    %1470 = vmatmul.mubr.f32.gmra.mrb[0].mxu0 %v198
    %v1471 = vpop.f32.mrb[0].mxu0
    %v1472 = vadd.f32 0.0, %v1471
    %v1473 = vpop.f32.mrb[0].mxu0
    %1474 = vmatprep.mubr.f32.mxu0 0.0
    %1475 = vmatmul.mubr.f32.gmra.mrb[0].mxu0 %v201
    %v1476 = vpop.f32.mrb[0].mxu0
    %v1477 = vadd.f32 0.0, %v1476
    %v1478 = vpop.f32.mrb[0].mxu0
    %1479 = vmatprep.mubr.f32.mxu0 0.0
    %1480 = vmatmul.mubr.f32.gmra.mrb[0].mxu0 %v204
    %v1481 = vpop.f32.mrb[0].mxu0
    %v1482 = vadd.f32 0.0, %v1481
    %v1483 = vpop.f32.mrb[0].mxu0
    %1484 = vdwg.mxu0
    %1485 = vmatprep.subr.mxu0 %v97
    %1486 = vmatpush1.msra.mxu0 %v96
    %1487 = vmatprep.subr.mxu0 %v100
    %1488 = vmatpush1.msra.mxu0 %v99
    %1489 = vmatprep.subr.mxu0 %v103
    %1490 = vmatpush1.msra.mxu0 %v102
    %1491 = vmatprep.subr.mxu0 %v106
    %1492 = vmatpush1.msra.mxu0 %v105
    %1493 = vmatprep.subr.mxu0 %v109
    %1494 = vmatpush1.msra.mxu0 %v108
    %1495 = vmatprep.subr.mxu0 %v112
    %1496 = vmatpush1.msra.mxu0 %v111
    %1497 = vmatprep.subr.mxu0 %v115
    %1498 = vmatpush1.msra.mxu0 %v114
    %1499 = vmatprep.subr.mxu0 %v118
    %1500 = vmatpush1.msra.mxu0 %v117
    %1501 = vmatprep.subr.mxu0 %v121
    %1502 = vmatpush1.msra.mxu0 %v120
    %1503 = vmatprep.subr.mxu0 %v124
    %1504 = vmatpush1.msra.mxu0 %v123
    %1505 = vmatprep.subr.mxu0 %v127
    %1506 = vmatpush1.msra.mxu0 %v126
    %1507 = vmatprep.subr.mxu0 %v130
    %1508 = vmatpush1.msra.mxu0 %v129
    %1509 = vmatprep.subr.mxu0 %v133
    %1510 = vmatpush1.msra.mxu0 %v132
    %1511 = vmatprep.subr.mxu0 %v136
    %1512 = vmatpush1.msra.mxu0 %v135
    %1513 = vmatprep.subr.mxu0 %v139
    %1514 = vmatpush1.msra.mxu0 %v138
    %1515 = vmatprep.subr.mxu0 %v142
    %1516 = vmatpush1.msra.mxu0 %v141
    %1517 = vmatprep.subr.mxu0 0.0
    %1518 = vmatpush1.msra.mxu0 0.0
    %1519 = vmatprep.subr.mxu0 0.0
    %1520 = vmatpush1.msra.mxu0 0.0
    %1521 = vmatprep.subr.mxu0 0.0
    %1522 = vmatpush1.msra.mxu0 0.0
    %1523 = vmatprep.subr.mxu0 0.0
    %1524 = vmatpush1.msra.mxu0 0.0
    %1525 = vmatprep.subr.mxu0 0.0
    %1526 = vmatpush1.msra.mxu0 0.0
    %1527 = vmatprep.subr.mxu0 0.0
    %1528 = vmatpush1.msra.mxu0 0.0
    %1529 = vmatprep.subr.mxu0 0.0
    %1530 = vmatpush1.msra.mxu0 0.0
    %1531 = vmatprep.subr.mxu0 0.0
    %1532 = vmatpush1.msra.mxu0 0.0
    %1533 = vmatprep.subr.mxu0 0.0
    %1534 = vmatpush1.msra.mxu0 0.0
    %1535 = vmatprep.subr.mxu0 0.0
    %1536 = vmatpush1.msra.mxu0 0.0
    %1537 = vmatprep.subr.mxu0 0.0
    %1538 = vmatpush1.msra.mxu0 0.0
    %1539 = vmatprep.subr.mxu0 0.0
    %1540 = vmatpush1.msra.mxu0 0.0
    %1541 = vmatprep.subr.mxu0 0.0
    %1542 = vmatpush1.msra.mxu0 0.0
    %1543 = vmatprep.subr.mxu0 0.0
    %1544 = vmatpush1.msra.mxu0 0.0
    %1545 = vmatprep.subr.mxu0 0.0
    %1546 = vmatpush1.msra.mxu0 0.0
    %1547 = vmatprep.subr.mxu0 0.0
    %1548 = vmatpush1.msra.mxu0 0.0
    %1549 = vmatprep.mubr.f32.mxu0 0.0
    %1550 = vmatmul.mubr.f32.gmra.mrb[0].mxu0 %v1477
    %v1551 = vpop.f32.mrb[0].mxu0
    %v1552 = vadd.f32 0.0, %v1551
    %v1553 = vpop.f32.mrb[0].mxu0
    %v1554 = vadd.f32 0.0, %v1553
    %1555 = vmatprep.mubr.f32.mxu0 0.0
    %1556 = vmatmul.mubr.f32.gmra.mrb[0].mxu0 %v1482
    %v1557 = vpop.f32.mrb[0].mxu0
    %v1558 = vadd.f32 0.0, %v1557
    %v1559 = vpop.f32.mrb[0].mxu0
    %v1560 = vadd.f32 0.0, %v1559
    %1561 = vdwg.mxu0
    %1562 = vmatprep.subr.mxu0 0.0
    %1563 = vmatpush1.msra.mxu0 %v98
    %1564 = vmatprep.subr.mxu0 0.0
    %1565 = vmatpush1.msra.mxu0 %v101
    %1566 = vmatprep.subr.mxu0 0.0
    %1567 = vmatpush1.msra.mxu0 %v104
    %1568 = vmatprep.subr.mxu0 0.0
    %1569 = vmatpush1.msra.mxu0 %v107
    %1570 = vmatprep.subr.mxu0 0.0
    %1571 = vmatpush1.msra.mxu0 %v110
    %1572 = vmatprep.subr.mxu0 0.0
    %1573 = vmatpush1.msra.mxu0 %v113
    %1574 = vmatprep.subr.mxu0 0.0
    %1575 = vmatpush1.msra.mxu0 %v116
    %1576 = vmatprep.subr.mxu0 0.0
    %1577 = vmatpush1.msra.mxu0 %v119
    %1578 = vmatprep.subr.mxu0 0.0
    %1579 = vmatpush1.msra.mxu0 %v122
    %1580 = vmatprep.subr.mxu0 0.0
    %1581 = vmatpush1.msra.mxu0 %v125
    %1582 = vmatprep.subr.mxu0 0.0
    %1583 = vmatpush1.msra.mxu0 %v128
    %1584 = vmatprep.subr.mxu0 0.0
    %1585 = vmatpush1.msra.mxu0 %v131
    %1586 = vmatprep.subr.mxu0 0.0
    %1587 = vmatpush1.msra.mxu0 %v134
    %1588 = vmatprep.subr.mxu0 0.0
    %1589 = vmatpush1.msra.mxu0 %v137
    %1590 = vmatprep.subr.mxu0 0.0
    %1591 = vmatpush1.msra.mxu0 %v140
    %1592 = vmatprep.subr.mxu0 0.0
    %1593 = vmatpush1.msra.mxu0 %v143
    %1594 = vmatprep.subr.mxu0 0.0
    %1595 = vmatpush1.msra.mxu0 0.0
    %1596 = vmatprep.subr.mxu0 0.0
    %1597 = vmatpush1.msra.mxu0 0.0
    %1598 = vmatprep.subr.mxu0 0.0
    %1599 = vmatpush1.msra.mxu0 0.0
    %1600 = vmatprep.subr.mxu0 0.0
    %1601 = vmatpush1.msra.mxu0 0.0
    %1602 = vmatprep.subr.mxu0 0.0
    %1603 = vmatpush1.msra.mxu0 0.0
    %1604 = vmatprep.subr.mxu0 0.0
    %1605 = vmatpush1.msra.mxu0 0.0
    %1606 = vmatprep.subr.mxu0 0.0
    %1607 = vmatpush1.msra.mxu0 0.0
    %1608 = vmatprep.subr.mxu0 0.0
    %1609 = vmatpush1.msra.mxu0 0.0
    %1610 = vmatprep.subr.mxu0 0.0
    %1611 = vmatpush1.msra.mxu0 0.0
    %1612 = vmatprep.subr.mxu0 0.0
    %1613 = vmatpush1.msra.mxu0 0.0
    %1614 = vmatprep.subr.mxu0 0.0
    %1615 = vmatpush1.msra.mxu0 0.0
    %1616 = vmatprep.subr.mxu0 0.0
    %1617 = vmatpush1.msra.mxu0 0.0
    %1618 = vmatprep.subr.mxu0 0.0
    %1619 = vmatpush1.msra.mxu0 0.0
    %1620 = vmatprep.subr.mxu0 0.0
    %1621 = vmatpush1.msra.mxu0 0.0
    %1622 = vmatprep.subr.mxu0 0.0
    %1623 = vmatpush1.msra.mxu0 0.0
    %1624 = vmatprep.subr.mxu0 0.0
    %1625 = vmatpush1.msra.mxu0 0.0
    %1626 = vmatprep.mubr.f32.mxu0 0.0
    %1627 = vmatmul.mubr.f32.gmra.mrb[0].mxu0 %v1477
    %v1628 = vpop.f32.mrb[0].mxu0
    %v1629 = vadd.f32 0.0, %v1628
    %v1630 = vpop.f32.mrb[0].mxu0
    %1631 = vmatprep.mubr.f32.mxu0 0.0
    %1632 = vmatmul.mubr.f32.gmra.mrb[0].mxu0 %v1482
    %v1633 = vpop.f32.mrb[0].mxu0
    %v1634 = vadd.f32 0.0, %v1633
    %v1635 = vpop.f32.mrb[0].mxu0
    %1636 = vdwg.mxu0
    %1637 = vmatprep.subr.mxu0 %v49
    %1638 = vmatpush1.msra.mxu0 %v48
    %1639 = vmatprep.subr.mxu0 %v52
    %1640 = vmatpush1.msra.mxu0 %v51
    %1641 = vmatprep.subr.mxu0 %v55
    %1642 = vmatpush1.msra.mxu0 %v54
    %1643 = vmatprep.subr.mxu0 %v58
    %1644 = vmatpush1.msra.mxu0 %v57
    %1645 = vmatprep.subr.mxu0 %v61
    %1646 = vmatpush1.msra.mxu0 %v60
    %1647 = vmatprep.subr.mxu0 %v64
    %1648 = vmatpush1.msra.mxu0 %v63
    %1649 = vmatprep.subr.mxu0 %v67
    %1650 = vmatpush1.msra.mxu0 %v66
    %1651 = vmatprep.subr.mxu0 %v70
    %1652 = vmatpush1.msra.mxu0 %v69
    %1653 = vmatprep.subr.mxu0 %v73
    %1654 = vmatpush1.msra.mxu0 %v72
    %1655 = vmatprep.subr.mxu0 %v76
    %1656 = vmatpush1.msra.mxu0 %v75
    %1657 = vmatprep.subr.mxu0 %v79
    %1658 = vmatpush1.msra.mxu0 %v78
    %1659 = vmatprep.subr.mxu0 %v82
    %1660 = vmatpush1.msra.mxu0 %v81
    %1661 = vmatprep.subr.mxu0 %v85
    %1662 = vmatpush1.msra.mxu0 %v84
    %1663 = vmatprep.subr.mxu0 %v88
    %1664 = vmatpush1.msra.mxu0 %v87
    %1665 = vmatprep.subr.mxu0 %v91
    %1666 = vmatpush1.msra.mxu0 %v90
    %1667 = vmatprep.subr.mxu0 %v94
    %1668 = vmatpush1.msra.mxu0 %v93
    %1669 = vmatprep.subr.mxu0 0.0
    %1670 = vmatpush1.msra.mxu0 0.0
    %1671 = vmatprep.subr.mxu0 0.0
    %1672 = vmatpush1.msra.mxu0 0.0
    %1673 = vmatprep.subr.mxu0 0.0
    %1674 = vmatpush1.msra.mxu0 0.0
    %1675 = vmatprep.subr.mxu0 0.0
    %1676 = vmatpush1.msra.mxu0 0.0
    %1677 = vmatprep.subr.mxu0 0.0
    %1678 = vmatpush1.msra.mxu0 0.0
    %1679 = vmatprep.subr.mxu0 0.0
    %1680 = vmatpush1.msra.mxu0 0.0
    %1681 = vmatprep.subr.mxu0 0.0
    %1682 = vmatpush1.msra.mxu0 0.0
    %1683 = vmatprep.subr.mxu0 0.0
    %1684 = vmatpush1.msra.mxu0 0.0
    %1685 = vmatprep.subr.mxu0 0.0
    %1686 = vmatpush1.msra.mxu0 0.0
    %1687 = vmatprep.subr.mxu0 0.0
    %1688 = vmatpush1.msra.mxu0 0.0
    %1689 = vmatprep.subr.mxu0 0.0
    %1690 = vmatpush1.msra.mxu0 0.0
    %1691 = vmatprep.subr.mxu0 0.0
    %1692 = vmatpush1.msra.mxu0 0.0
    %1693 = vmatprep.subr.mxu0 0.0
    %1694 = vmatpush1.msra.mxu0 0.0
    %1695 = vmatprep.subr.mxu0 0.0
    %1696 = vmatpush1.msra.mxu0 0.0
    %1697 = vmatprep.subr.mxu0 0.0
    %1698 = vmatpush1.msra.mxu0 0.0
    %1699 = vmatprep.subr.mxu0 0.0
    %1700 = vmatpush1.msra.mxu0 0.0
    %1701 = vmatprep.mubr.f32.mxu0 0.0
    %1702 = vmatmul.mubr.f32.gmra.mrb[0].mxu0 %v1467
    %v1703 = vpop.f32.mrb[0].mxu0
    %v1704 = vadd.f32 %v1552, %v1703
    %v1705 = vpop.f32.mrb[0].mxu0
    %v1706 = vadd.f32 %v1554, %v1705
    %1707 = vmatprep.mubr.f32.mxu0 0.0
    %1708 = vmatmul.mubr.f32.gmra.mrb[0].mxu0 %v1472
    %v1709 = vpop.f32.mrb[0].mxu0
    %v1710 = vadd.f32 %v1558, %v1709
    %v1711 = vpop.f32.mrb[0].mxu0
    %v1712 = vadd.f32 %v1560, %v1711
    %1713 = vdwg.mxu0
    %1714 = vmatprep.subr.mxu0 0.0
    %1715 = vmatpush1.msra.mxu0 %v50
    %1716 = vmatprep.subr.mxu0 0.0
    %1717 = vmatpush1.msra.mxu0 %v53
    %1718 = vmatprep.subr.mxu0 0.0
    %1719 = vmatpush1.msra.mxu0 %v56
    %1720 = vmatprep.subr.mxu0 0.0
    %1721 = vmatpush1.msra.mxu0 %v59
    %1722 = vmatprep.subr.mxu0 0.0
    %1723 = vmatpush1.msra.mxu0 %v62
    %1724 = vmatprep.subr.mxu0 0.0
    %1725 = vmatpush1.msra.mxu0 %v65
    %1726 = vmatprep.subr.mxu0 0.0
    %1727 = vmatpush1.msra.mxu0 %v68
    %1728 = vmatprep.subr.mxu0 0.0
    %1729 = vmatpush1.msra.mxu0 %v71
    %1730 = vmatprep.subr.mxu0 0.0
    %1731 = vmatpush1.msra.mxu0 %v74
    %1732 = vmatprep.subr.mxu0 0.0
    %1733 = vmatpush1.msra.mxu0 %v77
    %1734 = vmatprep.subr.mxu0 0.0
    %1735 = vmatpush1.msra.mxu0 %v80
    %1736 = vmatprep.subr.mxu0 0.0
    %1737 = vmatpush1.msra.mxu0 %v83
    %1738 = vmatprep.subr.mxu0 0.0
    %1739 = vmatpush1.msra.mxu0 %v86
    %1740 = vmatprep.subr.mxu0 0.0
    %1741 = vmatpush1.msra.mxu0 %v89
    %1742 = vmatprep.subr.mxu0 0.0
    %1743 = vmatpush1.msra.mxu0 %v92
    %1744 = vmatprep.subr.mxu0 0.0
    %1745 = vmatpush1.msra.mxu0 %v95
    %1746 = vmatprep.subr.mxu0 0.0
    %1747 = vmatpush1.msra.mxu0 0.0
    %1748 = vmatprep.subr.mxu0 0.0
    %1749 = vmatpush1.msra.mxu0 0.0
    %1750 = vmatprep.subr.mxu0 0.0
    %1751 = vmatpush1.msra.mxu0 0.0
    %1752 = vmatprep.subr.mxu0 0.0
    %1753 = vmatpush1.msra.mxu0 0.0
    %1754 = vmatprep.subr.mxu0 0.0
    %1755 = vmatpush1.msra.mxu0 0.0
    %1756 = vmatprep.subr.mxu0 0.0
    %1757 = vmatpush1.msra.mxu0 0.0
    %1758 = vmatprep.subr.mxu0 0.0
    %1759 = vmatpush1.msra.mxu0 0.0
    %1760 = vmatprep.subr.mxu0 0.0
    %1761 = vmatpush1.msra.mxu0 0.0
    %1762 = vmatprep.subr.mxu0 0.0
    %1763 = vmatpush1.msra.mxu0 0.0
    %1764 = vmatprep.subr.mxu0 0.0
    %1765 = vmatpush1.msra.mxu0 0.0
    %1766 = vmatprep.subr.mxu0 0.0
    %1767 = vmatpush1.msra.mxu0 0.0
    %1768 = vmatprep.subr.mxu0 0.0
    %1769 = vmatpush1.msra.mxu0 0.0
    %1770 = vmatprep.subr.mxu0 0.0
    %1771 = vmatpush1.msra.mxu0 0.0
    %1772 = vmatprep.subr.mxu0 0.0
    %1773 = vmatpush1.msra.mxu0 0.0
    %1774 = vmatprep.subr.mxu0 0.0
    %1775 = vmatpush1.msra.mxu0 0.0
    %1776 = vmatprep.subr.mxu0 0.0
    %1777 = vmatpush1.msra.mxu0 0.0
    %1778 = vmatprep.mubr.f32.mxu0 0.0
    %1779 = vmatmul.mubr.f32.gmra.mrb[0].mxu0 %v1467
    %v1780 = vpop.f32.mrb[0].mxu0
    %v1781 = vadd.f32 %v1629, %v1780
    %v1782 = vpop.f32.mrb[0].mxu0
    %1783 = vmatprep.mubr.f32.mxu0 0.0
    %1784 = vmatmul.mubr.f32.gmra.mrb[0].mxu0 %v1472
    %v1785 = vpop.f32.mrb[0].mxu0
    %v1786 = vadd.f32 %v1634, %v1785
    %v1787 = vpop.f32.mrb[0].mxu0
    %1788 = vdwg.mxu0
    %v1789 = vadd.f32 %v1704, %v599
    %v1790 = vadd.f32 %v1706, %v603
    %v1791 = vadd.f32 %v1781, %v607
    %v1792 = vadd.f32 %v1710, %v599
    %v1793 = vadd.f32 %v1712, %v603
    %v1794 = vadd.f32 %v1786, %v607
    %1795 = vmatprep.subr.mxu0 %v145
    %1796 = vmatpush1.msra.mxu0 %v144
    %1797 = vmatprep.subr.mxu0 %v147
    %1798 = vmatpush1.msra.mxu0 %v146
    %1799 = vmatprep.subr.mxu0 %v149
    %1800 = vmatpush1.msra.mxu0 %v148
    %1801 = vmatprep.subr.mxu0 %v151
    %1802 = vmatpush1.msra.mxu0 %v150
    %1803 = vmatprep.subr.mxu0 %v153
    %1804 = vmatpush1.msra.mxu0 %v152
    %1805 = vmatprep.subr.mxu0 %v155
    %1806 = vmatpush1.msra.mxu0 %v154
    %1807 = vmatprep.subr.mxu0 %v157
    %1808 = vmatpush1.msra.mxu0 %v156
    %1809 = vmatprep.subr.mxu0 %v159
    %1810 = vmatpush1.msra.mxu0 %v158
    %1811 = vmatprep.subr.mxu0 %v161
    %1812 = vmatpush1.msra.mxu0 %v160
    %1813 = vmatprep.subr.mxu0 %v163
    %1814 = vmatpush1.msra.mxu0 %v162
    %1815 = vmatprep.subr.mxu0 %v165
    %1816 = vmatpush1.msra.mxu0 %v164
    %1817 = vmatprep.subr.mxu0 %v167
    %1818 = vmatpush1.msra.mxu0 %v166
    %1819 = vmatprep.subr.mxu0 %v169
    %1820 = vmatpush1.msra.mxu0 %v168
    %1821 = vmatprep.subr.mxu0 %v171
    %1822 = vmatpush1.msra.mxu0 %v170
    %1823 = vmatprep.subr.mxu0 %v173
    %1824 = vmatpush1.msra.mxu0 %v172
    %1825 = vmatprep.subr.mxu0 %v175
    %1826 = vmatpush1.msra.mxu0 %v174
    %1827 = vmatprep.subr.mxu0 0.0
    %1828 = vmatpush1.msra.mxu0 0.0
    %1829 = vmatprep.subr.mxu0 0.0
    %1830 = vmatpush1.msra.mxu0 0.0
    %1831 = vmatprep.subr.mxu0 0.0
    %1832 = vmatpush1.msra.mxu0 0.0
    %1833 = vmatprep.subr.mxu0 0.0
    %1834 = vmatpush1.msra.mxu0 0.0
    %1835 = vmatprep.subr.mxu0 0.0
    %1836 = vmatpush1.msra.mxu0 0.0
    %1837 = vmatprep.subr.mxu0 0.0
    %1838 = vmatpush1.msra.mxu0 0.0
    %1839 = vmatprep.subr.mxu0 0.0
    %1840 = vmatpush1.msra.mxu0 0.0
    %1841 = vmatprep.subr.mxu0 0.0
    %1842 = vmatpush1.msra.mxu0 0.0
    %1843 = vmatprep.subr.mxu0 0.0
    %1844 = vmatpush1.msra.mxu0 0.0
    %1845 = vmatprep.subr.mxu0 0.0
    %1846 = vmatpush1.msra.mxu0 0.0
    %1847 = vmatprep.subr.mxu0 0.0
    %1848 = vmatpush1.msra.mxu0 0.0
    %1849 = vmatprep.subr.mxu0 0.0
    %1850 = vmatpush1.msra.mxu0 0.0
    %1851 = vmatprep.subr.mxu0 0.0
    %1852 = vmatpush1.msra.mxu0 0.0
    %1853 = vmatprep.subr.mxu0 0.0
    %1854 = vmatpush1.msra.mxu0 0.0
    %1855 = vmatprep.subr.mxu0 0.0
    %1856 = vmatpush1.msra.mxu0 0.0
    %1857 = vmatprep.subr.mxu0 0.0
    %1858 = vmatpush1.msra.mxu0 0.0
    %1859 = vmatprep.mubr.f32.mxu0 0.0
    %1860 = vmatmul.mubr.f32.gmra.mrb[0].mxu0 %v1398
    %v1861 = vpop.f32.mrb[0].mxu0
    %v1862 = vadd.f32 0.0, %v1861
    %v1863 = vpop.f32.mrb[0].mxu0
    %v1864 = vadd.f32 0.0, %v1863
    %1865 = vmatprep.mubr.f32.mxu0 0.0
    %1866 = vmatmul.mubr.f32.gmra.mrb[0].mxu0 %v1399
    %v1867 = vpop.f32.mrb[0].mxu0
    %v1868 = vadd.f32 0.0, %v1867
    %v1869 = vpop.f32.mrb[0].mxu0
    %v1870 = vadd.f32 0.0, %v1869
    %1871 = vdwg.mxu0
    %v1872 = vadd.f32 %v1789, %v1862
    %v1873 = vadd.f32 %v1792, %v1868
    %v1874 = vxor.u32 %v1872, 2147483648
    %v1875 = vxor.u32 %v1873, 2147483648
    %v1876 = vmul.f32 %v1874, 1.442695
    %v1877 = vpow.pop %v1876
    %v1878 = vmul.f32 %v1875, 1.442695
    %v1879 = vpow.pop %v1878
    %v1880 = vadd.f32 %v1877, 1.0
    %v1881 = vadd.f32 %v1879, 1.0
    %v1882 = vrcp.pop %v1880
    %v1883 = vmul.f32 1.0, %v1882
    %v1884 = vrcp.pop %v1881
    %v1885 = vmul.f32 1.0, %v1884
    %v1886 = vadd.f32 %v1790, %v1864
    %v1887 = vadd.f32 %v1793, %v1870
    %v1888 = vxor.u32 %v1886, 2147483648
    %v1889 = vxor.u32 %v1887, 2147483648
    %v1890 = vmul.f32 %v1888, 1.442695
    %v1891 = vpow.pop %v1890
    %v1892 = vmul.f32 %v1889, 1.442695
    %v1893 = vpow.pop %v1892
    %v1894 = vadd.f32 %v1891, 1.0
    %v1895 = vadd.f32 %v1893, 1.0
    %v1896 = vrcp.pop %v1894
    %v1897 = vmul.f32 1.0, %v1896
    %v1898 = vrcp.pop %v1895
    %v1899 = vmul.f32 1.0, %v1898
    %v1900 = vmul.f32 %v1883, %v1398
    %v1901 = vmul.f32 %v1885, %v1399
    %1902 = vmatprep.subr.mxu0 0.0
    %1903 = vmatpush1.msra.mxu0 %v176
    %1904 = vmatprep.subr.mxu0 0.0
    %1905 = vmatpush1.msra.mxu0 %v177
    %1906 = vmatprep.subr.mxu0 0.0
    %1907 = vmatpush1.msra.mxu0 %v178
    %1908 = vmatprep.subr.mxu0 0.0
    %1909 = vmatpush1.msra.mxu0 %v179
    %1910 = vmatprep.subr.mxu0 0.0
    %1911 = vmatpush1.msra.mxu0 %v180
    %1912 = vmatprep.subr.mxu0 0.0
    %1913 = vmatpush1.msra.mxu0 %v181
    %1914 = vmatprep.subr.mxu0 0.0
    %1915 = vmatpush1.msra.mxu0 %v182
    %1916 = vmatprep.subr.mxu0 0.0
    %1917 = vmatpush1.msra.mxu0 %v183
    %1918 = vmatprep.subr.mxu0 0.0
    %1919 = vmatpush1.msra.mxu0 %v184
    %1920 = vmatprep.subr.mxu0 0.0
    %1921 = vmatpush1.msra.mxu0 %v185
    %1922 = vmatprep.subr.mxu0 0.0
    %1923 = vmatpush1.msra.mxu0 %v186
    %1924 = vmatprep.subr.mxu0 0.0
    %1925 = vmatpush1.msra.mxu0 %v187
    %1926 = vmatprep.subr.mxu0 0.0
    %1927 = vmatpush1.msra.mxu0 %v188
    %1928 = vmatprep.subr.mxu0 0.0
    %1929 = vmatpush1.msra.mxu0 %v189
    %1930 = vmatprep.subr.mxu0 0.0
    %1931 = vmatpush1.msra.mxu0 %v190
    %1932 = vmatprep.subr.mxu0 0.0
    %1933 = vmatpush1.msra.mxu0 %v191
    %1934 = vmatprep.subr.mxu0 0.0
    %1935 = vmatpush1.msra.mxu0 0.0
    %1936 = vmatprep.subr.mxu0 0.0
    %1937 = vmatpush1.msra.mxu0 0.0
    %1938 = vmatprep.subr.mxu0 0.0
    %1939 = vmatpush1.msra.mxu0 0.0
    %1940 = vmatprep.subr.mxu0 0.0
    %1941 = vmatpush1.msra.mxu0 0.0
    %1942 = vmatprep.subr.mxu0 0.0
    %1943 = vmatpush1.msra.mxu0 0.0
    %1944 = vmatprep.subr.mxu0 0.0
    %1945 = vmatpush1.msra.mxu0 0.0
    %1946 = vmatprep.subr.mxu0 0.0
    %1947 = vmatpush1.msra.mxu0 0.0
    %1948 = vmatprep.subr.mxu0 0.0
    %1949 = vmatpush1.msra.mxu0 0.0
    %1950 = vmatprep.subr.mxu0 0.0
    %1951 = vmatpush1.msra.mxu0 0.0
    %1952 = vmatprep.subr.mxu0 0.0
    %1953 = vmatpush1.msra.mxu0 0.0
    %1954 = vmatprep.subr.mxu0 0.0
    %1955 = vmatpush1.msra.mxu0 0.0
    %1956 = vmatprep.subr.mxu0 0.0
    %1957 = vmatpush1.msra.mxu0 0.0
    %1958 = vmatprep.subr.mxu0 0.0
    %1959 = vmatpush1.msra.mxu0 0.0
    %1960 = vmatprep.subr.mxu0 0.0
    %1961 = vmatpush1.msra.mxu0 0.0
    %1962 = vmatprep.subr.mxu0 0.0
    %1963 = vmatpush1.msra.mxu0 0.0
    %1964 = vmatprep.subr.mxu0 0.0
    %1965 = vmatpush1.msra.mxu0 0.0
    %1966 = vmatprep.mubr.f32.mxu0 0.0
    %1967 = vmatmul.mubr.f32.gmra.mrb[0].mxu0 %v1900
    %v1968 = vpop.f32.mrb[0].mxu0
    %v1969 = vadd.f32 0.0, %v1968
    %v1970 = vpop.f32.mrb[0].mxu0
    %1971 = vmatprep.mubr.f32.mxu0 0.0
    %1972 = vmatmul.mubr.f32.gmra.mrb[0].mxu0 %v1901
    %v1973 = vpop.f32.mrb[0].mxu0
    %v1974 = vadd.f32 0.0, %v1973
    %v1975 = vpop.f32.mrb[0].mxu0
    %1976 = vdwg.mxu0
    %v1977 = vadd.f32 %v1791, %v1969
    %v1978 = vadd.f32 %v1794, %v1974
    %v1979 = vtanh.pop %v1977
    %v1980 = vtanh.pop %v1978
    %v1981 = vsub.f32 1.0, %v1897
    %v1982 = vsub.f32 1.0, %v1899
    %v1983 = vmul.f32 %v1981, %v1398
    %v1984 = vmul.f32 %v1982, %v1399
    %v1985 = vmul.f32 %v1897, %v1979
    %v1986 = vmul.f32 %v1899, %v1980
    %v1987 = vadd.f32 %v1983, %v1985
    %v1988 = vadd.f32 %v1984, %v1986
    %v1989 = vld [vmem:[%s9] sm:$0xff]
    %v1990 = vld [vmem:[%s9 + $0x8] sm:$0xff]
    %v1991 = vld [vmem:[%s9 + $0x10] sm:$0xff]
    %v1992 = vld [vmem:[%s9 + $0x18] sm:$0xff]
    %v1993 = vld [vmem:[%s9 + $0x20] sm:$0xff]
    %v1994 = vld [vmem:[%s9 + $0x28] sm:$0xff]
    %v1995 = vld [vmem:[%s9 + $0x30] sm:$0xff]
    %v1996 = vld [vmem:[%s9 + $0x38] sm:$0xff]
    %v1997 = vld [vmem:[%s9 + $0x40] sm:$0xff]
    %v1998 = vld [vmem:[%s9 + $0x48] sm:$0xff]
    %v1999 = vld [vmem:[%s9 + $0x50] sm:$0xff]
    %v2000 = vld [vmem:[%s9 + $0x58] sm:$0xff]
    %v2001 = vld [vmem:[%s9 + $0x60] sm:$0xff]
    %v2002 = vld [vmem:[%s9 + $0x68] sm:$0xff]
    %v2003 = vld [vmem:[%s9 + $0x70] sm:$0xff]
    %v2004 = vld [vmem:[%s9 + $0x78] sm:$0xff]
    %v2005 = vld [vmem:[%s9 + $0x80] sm:$0xff]
    %v2006 = vld [vmem:[%s9 + $0x88] sm:$0xff]
    %v2007 = vld [vmem:[%s9 + $0x90] sm:$0xff]
    %v2008 = vld [vmem:[%s9 + $0x98] sm:$0xff]
    %v2009 = vld [vmem:[%s9 + $0xa0] sm:$0xff]
    %v2010 = vld [vmem:[%s9 + $0xa8] sm:$0xff]
    %v2011 = vld [vmem:[%s9 + $0xb0] sm:$0xff]
    %v2012 = vld [vmem:[%s9 + $0xb8] sm:$0xff]
    %v2013 = vld [vmem:[%s9 + $0xc0] sm:$0xff]
    %v2014 = vld [vmem:[%s9 + $0xc8] sm:$0xff]
    %v2015 = vld [vmem:[%s9 + $0xd0] sm:$0xff]
    %v2016 = vld [vmem:[%s9 + $0xd8] sm:$0xff]
    %v2017 = vld [vmem:[%s9 + $0xe0] sm:$0xff]
    %v2018 = vld [vmem:[%s9 + $0xe8] sm:$0xff]
    %v2019 = vld [vmem:[%s9 + $0xf0] sm:$0xff]
    %v2020 = vld [vmem:[%s9 + $0xf8] sm:$0xff]
    %2021 = vmatprep.subr.mxu0 %v1990
    %2022 = vmatpush1.msra.mxu0 %v1989
    %2023 = vmatprep.subr.mxu0 %v1992
    %2024 = vmatpush1.msra.mxu0 %v1991
    %2025 = vmatprep.subr.mxu0 %v1994
    %2026 = vmatpush1.msra.mxu0 %v1993
    %2027 = vmatprep.subr.mxu0 %v1996
    %2028 = vmatpush1.msra.mxu0 %v1995
    %2029 = vmatprep.subr.mxu0 %v1998
    %2030 = vmatpush1.msra.mxu0 %v1997
    %2031 = vmatprep.subr.mxu0 %v2000
    %2032 = vmatpush1.msra.mxu0 %v1999
    %2033 = vmatprep.subr.mxu0 %v2002
    %2034 = vmatpush1.msra.mxu0 %v2001
    %2035 = vmatprep.subr.mxu0 %v2004
    %2036 = vmatpush1.msra.mxu0 %v2003
    %2037 = vmatprep.subr.mxu0 %v2006
    %2038 = vmatpush1.msra.mxu0 %v2005
    %2039 = vmatprep.subr.mxu0 %v2008
    %2040 = vmatpush1.msra.mxu0 %v2007
    %2041 = vmatprep.subr.mxu0 %v2010
    %2042 = vmatpush1.msra.mxu0 %v2009
    %2043 = vmatprep.subr.mxu0 %v2012
    %2044 = vmatpush1.msra.mxu0 %v2011
    %2045 = vmatprep.subr.mxu0 %v2014
    %2046 = vmatpush1.msra.mxu0 %v2013
    %2047 = vmatprep.subr.mxu0 %v2016
    %2048 = vmatpush1.msra.mxu0 %v2015
    %2049 = vmatprep.subr.mxu0 %v2018
    %2050 = vmatpush1.msra.mxu0 %v2017
    %2051 = vmatprep.subr.mxu0 %v2020
    %2052 = vmatpush1.msra.mxu0 %v2019
    %2053 = vmatprep.subr.mxu0 0.0
    %2054 = vmatpush1.msra.mxu0 0.0
    %2055 = vmatprep.subr.mxu0 0.0
    %2056 = vmatpush1.msra.mxu0 0.0
    %2057 = vmatprep.subr.mxu0 0.0
    %2058 = vmatpush1.msra.mxu0 0.0
    %2059 = vmatprep.subr.mxu0 0.0
    %2060 = vmatpush1.msra.mxu0 0.0
    %2061 = vmatprep.subr.mxu0 0.0
    %2062 = vmatpush1.msra.mxu0 0.0
    %2063 = vmatprep.subr.mxu0 0.0
    %2064 = vmatpush1.msra.mxu0 0.0
    %2065 = vmatprep.subr.mxu0 0.0
    %2066 = vmatpush1.msra.mxu0 0.0
    %2067 = vmatprep.subr.mxu0 0.0
    %2068 = vmatpush1.msra.mxu0 0.0
    %2069 = vmatprep.subr.mxu0 0.0
    %2070 = vmatpush1.msra.mxu0 0.0
    %2071 = vmatprep.subr.mxu0 0.0
    %2072 = vmatpush1.msra.mxu0 0.0
    %2073 = vmatprep.subr.mxu0 0.0
    %2074 = vmatpush1.msra.mxu0 0.0
    %2075 = vmatprep.subr.mxu0 0.0
    %2076 = vmatpush1.msra.mxu0 0.0
    %2077 = vmatprep.subr.mxu0 0.0
    %2078 = vmatpush1.msra.mxu0 0.0
    %2079 = vmatprep.subr.mxu0 0.0
    %2080 = vmatpush1.msra.mxu0 0.0
    %2081 = vmatprep.subr.mxu0 0.0
    %2082 = vmatpush1.msra.mxu0 0.0
    %2083 = vmatprep.subr.mxu0 0.0
    %2084 = vmatpush1.msra.mxu0 0.0
    %2085 = vmatprep.mubr.f32.mxu0 0.0
    %2086 = vmatmul.mubr.f32.gmra.mrb[0].mxu0 %v1987
    %v2087 = vpop.f32.mrb[0].mxu0
    %v2088 = vadd.f32 0.0, %v2087
    %v2089 = vpop.f32.mrb[0].mxu0
    %v2090 = vadd.f32 0.0, %v2089
    %2091 = vmatprep.mubr.f32.mxu0 0.0
    %2092 = vmatmul.mubr.f32.gmra.mrb[0].mxu0 %v1988
    %v2093 = vpop.f32.mrb[0].mxu0
    %v2094 = vadd.f32 0.0, %v2093
    %v2095 = vpop.f32.mrb[0].mxu0
    %v2096 = vadd.f32 0.0, %v2095
    %2097 = vdwg.mxu0
    %v2098 = vld [vmem:[%s10] sm:$0xff]
    %v2099 = vld [vmem:[%s10 + $0x8] sm:$0xff]
    %v2100 = vld [vmem:[%s10 + $0x10] sm:$0xff]
    %v2101 = vld [vmem:[%s10 + $0x18] sm:$0xff]
    %v2102 = vmul.f32 %v2088, %v2098
    %v2103 = vmul.f32 %v2090, %v2099
    %v2104 = vmul.f32 %v2094, %v2100
    %v2105 = vmul.f32 %v2096, %v2101
    %v2106 = vld [vmem:[%s11] sm:$0x3]
    %v2108 = vsel %vm193, %v2106, 0
    %2110 = vmatprep.subr.mxu0 %v2103
    %2111 = vmatpush1.msra.mxu0 %v2102
    %2112 = vmatprep.subr.mxu0 %v2105
    %2113 = vmatpush1.msra.mxu0 %v2104
    %2114 = vmatprep.subr.mxu0 0.0
    %2115 = vmatpush1.msra.mxu0 0.0
    %2116 = vmatprep.subr.mxu0 0.0
    %2117 = vmatpush1.msra.mxu0 0.0
    %2118 = vmatprep.subr.mxu0 0.0
    %2119 = vmatpush1.msra.mxu0 0.0
    %2120 = vmatprep.subr.mxu0 0.0
    %2121 = vmatpush1.msra.mxu0 0.0
    %2122 = vmatprep.subr.mxu0 0.0
    %2123 = vmatpush1.msra.mxu0 0.0
    %2124 = vmatprep.subr.mxu0 0.0
    %2125 = vmatpush1.msra.mxu0 0.0
    %2126 = vmatprep.subr.mxu0 0.0
    %2127 = vmatpush1.msra.mxu0 0.0
    %2128 = vmatprep.subr.mxu0 0.0
    %2129 = vmatpush1.msra.mxu0 0.0
    %2130 = vmatprep.subr.mxu0 0.0
    %2131 = vmatpush1.msra.mxu0 0.0
    %2132 = vmatprep.subr.mxu0 0.0
    %2133 = vmatpush1.msra.mxu0 0.0
    %2134 = vmatprep.subr.mxu0 0.0
    %2135 = vmatpush1.msra.mxu0 0.0
    %2136 = vmatprep.subr.mxu0 0.0
    %2137 = vmatpush1.msra.mxu0 0.0
    %2138 = vmatprep.subr.mxu0 0.0
    %2139 = vmatpush1.msra.mxu0 0.0
    %2140 = vmatprep.subr.mxu0 0.0
    %2141 = vmatpush1.msra.mxu0 0.0
    %2142 = vmatprep.subr.mxu0 0.0
    %2143 = vmatpush1.msra.mxu0 0.0
    %2144 = vmatprep.subr.mxu0 0.0
    %2145 = vmatpush1.msra.mxu0 0.0
    %2146 = vmatprep.subr.mxu0 0.0
    %2147 = vmatpush1.msra.mxu0 0.0
    %2148 = vmatprep.subr.mxu0 0.0
    %2149 = vmatpush1.msra.mxu0 0.0
    %2150 = vmatprep.subr.mxu0 0.0
    %2151 = vmatpush1.msra.mxu0 0.0
    %2152 = vmatprep.subr.mxu0 0.0
    %2153 = vmatpush1.msra.mxu0 0.0
    %2154 = vmatprep.subr.mxu0 0.0
    %2155 = vmatpush1.msra.mxu0 0.0
    %2156 = vmatprep.subr.mxu0 0.0
    %2157 = vmatpush1.msra.mxu0 0.0
    %2158 = vmatprep.subr.mxu0 0.0
    %2159 = vmatpush1.msra.mxu0 0.0
    %2160 = vmatprep.subr.mxu0 0.0
    %2161 = vmatpush1.msra.mxu0 0.0
    %2162 = vmatprep.subr.mxu0 0.0
    %2163 = vmatpush1.msra.mxu0 0.0
    %2164 = vmatprep.subr.mxu0 0.0
    %2165 = vmatpush1.msra.mxu0 0.0
    %2166 = vmatprep.subr.mxu0 0.0
    %2167 = vmatpush1.msra.mxu0 0.0
    %2168 = vmatprep.subr.mxu0 0.0
    %2169 = vmatpush1.msra.mxu0 0.0
    %2170 = vmatprep.subr.mxu0 0.0
    %2171 = vmatpush1.msra.mxu0 0.0
    %2172 = vmatprep.subr.mxu0 0.0
    %2173 = vmatpush1.msra.mxu0 0.0
    %2174 = vmatprep.mubr.f32.mxu0 0.0
    %2175 = vmatmul.mubr.f32.gmra.mrb[0].mxu0 %v2108
    %v2176 = vpop.f32.mrb[0].mxu0
    %v2177 = vadd.f32 0.0, %v2176
    %v2178 = vpop.f32.mrb[0].mxu0
    %v2179 = vadd.f32 0.0, %v2178
    %2180 = vdwg.mxu0
    %v2181 = vld [vmem:[%s7] sm:$0xff]
    %v2182 = vld [vmem:[%s7 + $0x8] sm:$0xff]
    %v2183 = vld [vmem:[%s7 + $0x10] sm:$0xff]
    %v2184 = vld [vmem:[%s7 + $0x18] sm:$0xff]
    %v2185 = vld [vmem:[%s7 + $0x20] sm:$0xff]
    %v2186 = vld [vmem:[%s7 + $0x28] sm:$0xff]
    %v2187 = vld [vmem:[%s7 + $0x30] sm:$0xff]
    %v2188 = vld [vmem:[%s7 + $0x38] sm:$0xff]
    %v2189 = vld [vmem:[%s7 + $0x40] sm:$0xff]
    %v2190 = vld [vmem:[%s7 + $0x48] sm:$0xff]
    %v2191 = vld [vmem:[%s7 + $0x50] sm:$0xff]
    %v2192 = vld [vmem:[%s7 + $0x58] sm:$0xff]
    %v2193 = vld [vmem:[%s7 + $0x60] sm:$0xff]
    %v2194 = vld [vmem:[%s7 + $0x68] sm:$0xff]
    %v2195 = vld [vmem:[%s7 + $0x70] sm:$0xff]
    %v2196 = vld [vmem:[%s7 + $0x78] sm:$0xff]
    %v2197 = vld [vmem:[%s7 + $0x80] sm:$0xff]
    %v2198 = vld [vmem:[%s7 + $0x88] sm:$0xff]
    %v2199 = vld [vmem:[%s7 + $0x90] sm:$0xff]
    %v2200 = vld [vmem:[%s7 + $0x98] sm:$0xff]
    %v2201 = vld [vmem:[%s7 + $0xa0] sm:$0xff]
    %v2202 = vld [vmem:[%s7 + $0xa8] sm:$0xff]
    %v2203 = vld [vmem:[%s7 + $0xb0] sm:$0xff]
    %v2204 = vld [vmem:[%s7 + $0xb8] sm:$0xff]
    %v2205 = vld [vmem:[%s7 + $0xc0] sm:$0xff]
    %v2206 = vld [vmem:[%s7 + $0xc8] sm:$0xff]
    %v2207 = vld [vmem:[%s7 + $0xd0] sm:$0xff]
    %v2208 = vld [vmem:[%s7 + $0xd8] sm:$0xff]
    %v2209 = vld [vmem:[%s7 + $0xe0] sm:$0xff]
    %v2210 = vld [vmem:[%s7 + $0xe8] sm:$0xff]
    %v2211 = vld [vmem:[%s7 + $0xf0] sm:$0xff]
    %v2212 = vld [vmem:[%s7 + $0xf8] sm:$0xff]
    %v2213 = vld [vmem:[%s8] sm:$0x1]
    %v2215 = vlaneseq
    %v2216 = vshrl.u32 %v2215, 7
    %v2217 = vsub.s32 0, %v2216
    %v2218 = vrot.slane %v2213, %v2217
    %2220 = vmatprep.subr.mxu0 0.0
    %2221 = vmatpush1.msra.mxu0 %v2181
    %2222 = vmatprep.subr.mxu0 0.0
    %2223 = vmatpush1.msra.mxu0 %v2182
    %2224 = vmatprep.subr.mxu0 0.0
    %2225 = vmatpush1.msra.mxu0 %v2183
    %2226 = vmatprep.subr.mxu0 0.0
    %2227 = vmatpush1.msra.mxu0 %v2184
    %2228 = vmatprep.subr.mxu0 0.0
    %2229 = vmatpush1.msra.mxu0 %v2185
    %2230 = vmatprep.subr.mxu0 0.0
    %2231 = vmatpush1.msra.mxu0 %v2186
    %2232 = vmatprep.subr.mxu0 0.0
    %2233 = vmatpush1.msra.mxu0 %v2187
    %2234 = vmatprep.subr.mxu0 0.0
    %2235 = vmatpush1.msra.mxu0 %v2188
    %2236 = vmatprep.subr.mxu0 0.0
    %2237 = vmatpush1.msra.mxu0 %v2189
    %2238 = vmatprep.subr.mxu0 0.0
    %2239 = vmatpush1.msra.mxu0 %v2190
    %2240 = vmatprep.subr.mxu0 0.0
    %2241 = vmatpush1.msra.mxu0 %v2191
    %2242 = vmatprep.subr.mxu0 0.0
    %2243 = vmatpush1.msra.mxu0 %v2192
    %2244 = vmatprep.subr.mxu0 0.0
    %2245 = vmatpush1.msra.mxu0 %v2193
    %2246 = vmatprep.subr.mxu0 0.0
    %2247 = vmatpush1.msra.mxu0 %v2194
    %2248 = vmatprep.subr.mxu0 0.0
    %2249 = vmatpush1.msra.mxu0 %v2195
    %2250 = vmatprep.subr.mxu0 0.0
    %2251 = vmatpush1.msra.mxu0 %v2196
    %2252 = vmatprep.subr.mxu0 0.0
    %2253 = vmatpush1.msra.mxu0 %v2197
    %2254 = vmatprep.subr.mxu0 0.0
    %2255 = vmatpush1.msra.mxu0 %v2198
    %2256 = vmatprep.subr.mxu0 0.0
    %2257 = vmatpush1.msra.mxu0 %v2199
    %2258 = vmatprep.subr.mxu0 0.0
    %2259 = vmatpush1.msra.mxu0 %v2200
    %2260 = vmatprep.subr.mxu0 0.0
    %2261 = vmatpush1.msra.mxu0 %v2201
    %2262 = vmatprep.subr.mxu0 0.0
    %2263 = vmatpush1.msra.mxu0 %v2202
    %2264 = vmatprep.subr.mxu0 0.0
    %2265 = vmatpush1.msra.mxu0 %v2203
    %2266 = vmatprep.subr.mxu0 0.0
    %2267 = vmatpush1.msra.mxu0 %v2204
    %2268 = vmatprep.subr.mxu0 0.0
    %2269 = vmatpush1.msra.mxu0 %v2205
    %2270 = vmatprep.subr.mxu0 0.0
    %2271 = vmatpush1.msra.mxu0 %v2206
    %2272 = vmatprep.subr.mxu0 0.0
    %2273 = vmatpush1.msra.mxu0 %v2207
    %2274 = vmatprep.subr.mxu0 0.0
    %2275 = vmatpush1.msra.mxu0 %v2208
    %2276 = vmatprep.subr.mxu0 0.0
    %2277 = vmatpush1.msra.mxu0 %v2209
    %2278 = vmatprep.subr.mxu0 0.0
    %2279 = vmatpush1.msra.mxu0 %v2210
    %2280 = vmatprep.subr.mxu0 0.0
    %2281 = vmatpush1.msra.mxu0 %v2211
    %2282 = vmatprep.subr.mxu0 0.0
    %2283 = vmatpush1.msra.mxu0 %v2212
    %2284 = vmatprep.mubr.f32.mxu0 %v2179
    %2285 = vmatmul.mubr.f32.gmra.mrb[0].mxu0 %v2177
    %v2286 = vpop.f32.mrb[0].mxu0
    %v2287 = vadd.f32 %v2218, %v2286
    %v2288 = vpop.f32.mrb[0].mxu0
    %2289 = vdwg.mxu0
    %v2290 = vxor.u32 %v2287, 2147483648
    %v2291 = vmul.f32 %v2290, 1.442695
    %v2292 = vpow.pop %v2291
    %v2293 = vadd.f32 %v2292, 1.0
    %v2294 = vrcp.pop %v2293
    %v2295 = vmul.f32 1.0, %v2294
    %2296 = vst [vmem:[#allocation2] sm:$0x3] %v2295
    // Predicated region
    $region50: #{ggnn_forward.1} parent=1 // pred_check
      _
    $region51: #{ggnn_forward.1} parent=1 // pred_check_branch
      %2298 = sbr.rel (0) target = $region53
    $region52: #{ggnn_forward.1} parent=1 // pred_region
      %s2300 = ssub.s32 32, 32
      %2301 = vsyncadd [#allocation3], %s2300
      %s2303 = sshll.u32 [#allocation2], 4
      %s2304 = int_to_ptr.vmem [resolvable:$true] %s2303
      %2306 = dma.vmem_to_hbm [thread:$0]  %s2304, 32, %s12, [#allocation3]
    $region53: #{ggnn_forward.1} parent=1 // pred_fallthru
      _
    // Predicated region
    $region54: #{ggnn_forward.1} parent=1 // pred_check
      _
    $region55: #{ggnn_forward.1} parent=1 // pred_check_branch
      %2308 = sbr.rel (0) target = $region57
    $region56: #{ggnn_forward.1} parent=1 // pred_region
      %2309 = dma.done [#allocation3], 32
    $region57: #{ggnn_forward.1} parent=1 // pred_fallthru
      _
    %2310 = vsyncpa [#allocation3], 1

</llo_original>
